<compile_context>
chip_gen: v5e
topology: v5e:2x2
jax: 0.10.0
libtpu: 0.0.40
codegen_flags: <defaults>
</compile_context>

<pallas_src>
import functools

import jax
import jax.numpy as jnp
from jax import lax
from jax.experimental import pallas as pl
from jax.experimental.pallas import tpu as pltpu


# ----------------------------------------------------------------------------
# Weight fusion helpers (run once at init, plain XLA)
# ----------------------------------------------------------------------------
def _interleave_gate_cols(mats, H):
    """mats: per-direction (D, 4H) arrays with PyTorch gate order [i|f|g|o].
    Returns (D, 4*nd*H) with column layout [i_0..i_{nd-1} | f_* | g_* | o_*]."""
    nd = len(mats)
    D = mats[0].shape[0]
    r = [m.reshape(D, 4, 1, H) for m in mats]
    return jnp.concatenate(r, axis=2).reshape(D, 4 * nd * H)


def _block_diag_whh(whh_list, H):
    """whh_list: per-direction (H, 4H) recurrent weights.  Returns the
    (nd*H, 4*nd*H) block matrix so that [h_0 | ... | h_{nd-1}] @ W yields the
    interleaved recurrent gate contributions of all directions in one matmul."""
    nd = len(whh_list)
    rows = []
    for d, w in enumerate(whh_list):
        blocks = [w.reshape(H, 4, 1, H) if j == d
                  else jnp.zeros((H, 4, 1, H), w.dtype) for j in range(nd)]
        rows.append(jnp.concatenate(blocks, axis=2).reshape(H, 4 * nd * H))
    return jnp.concatenate(rows, axis=0)


# ----------------------------------------------------------------------------
# Fused per-step LSTM update (both directions, all stacked sequences)
# ----------------------------------------------------------------------------
def _lstm_step(h, c, gates_t, whh, D2):
    # gates_t already contains x@Wih + bias (precomputed outside the recurrence)
    g = gates_t + jnp.dot(h, whh, preferred_element_type=jnp.float32)  # (N, 4*D2)
    sig = jax.nn.sigmoid(g)                  # one wide EUP pass covers i, f, o lanes
    i_g = sig[:, 0 * D2:1 * D2]
    f_g = sig[:, 1 * D2:2 * D2]
    g_g = jnp.tanh(g[:, 2 * D2:3 * D2])      # second EUP pass (g lanes only)
    o_g = sig[:, 3 * D2:4 * D2]
    c_new = f_g * c + i_g * g_g
    h_new = o_g * jnp.tanh(c_new)            # third EUP pass
    return h_new, c_new


# ----------------------------------------------------------------------------
# Kernel 1 (used only when num_layers > 1): recurrence emitting hidden sequence
# ----------------------------------------------------------------------------
def bilstm_seq_kernel(gates_ref, whh_ref, *seq_refs, T, H, bi, D2, unroll):
    N = gates_ref.shape[1]
    whh = whh_ref[...]

    def step(t, carry):
        h, c = carry
        h, c = _lstm_step(h, c, gates_ref[t], whh, D2)
        seq_refs[0][t] = h[:, 0:H]                      # forward dir at time t
        if bi == 2:
            seq_refs[1][T - 1 - t] = h[:, H:2 * H]      # reverse dir, original time
        return h, c

    init = (jnp.zeros((N, D2), jnp.float32), jnp.zeros((N, D2), jnp.float32))
    lax.fori_loop(0, T, step, init, unroll=unroll)


# ----------------------------------------------------------------------------
# Kernel 2 (last layer): recurrence + max-over-time + fused classifier head
# ----------------------------------------------------------------------------
def bilstm_head_kernel(gates_ref, whh_ref, w1_ref, b1_ref, w2_ref, b2_ref,
                       w3_ref, b3_ref, out_ref, *, T, D2, B, multi, unroll):
    N = gates_ref.shape[1]
    whh = whh_ref[...]

    def step(t, carry):
        h, c, m = carry
        h, c = _lstm_step(h, c, gates_ref[t], whh, D2)
        return h, c, jnp.maximum(m, h)

    init = (jnp.zeros((N, D2), jnp.float32),
            jnp.zeros((N, D2), jnp.float32),
            jnp.full((N, D2), -jnp.inf, jnp.float32))
    _, _, m = lax.fori_loop(0, T, step, init, unroll=unroll)

    # Rows of m are ordered (input_idx, batch); reassemble (B, multi*D2)
    # classifier features == torch.cat([pool1, pool2, pool3], dim=1).
    feats = jnp.concatenate([m[k * B:(k + 1) * B, :] for k in range(multi)], axis=-1)

    z = jnp.dot(feats, w1_ref[...], preferred_element_type=jnp.float32) + b1_ref[...]
    z = jnp.maximum(z, 0.0)
    z = jnp.dot(z, w2_ref[...], preferred_element_type=jnp.float32) + b2_ref[...]
    z = jnp.maximum(z, 0.0)
    out_ref[...] = jnp.dot(z, w3_ref[...], preferred_element_type=jnp.float32) + b3_ref[...]


# ----------------------------------------------------------------------------
# pallas_call wrappers (everything fits VMEM at these shapes; no grid)
# ----------------------------------------------------------------------------
_VMEM = pl.BlockSpec(memory_space=pltpu.MemorySpace.VMEM)


def bilstm_seq_pallas(gates, whh_bd, *, H, bi, D2):
    T, N, _ = gates.shape
    kern = functools.partial(bilstm_seq_kernel, T=T, H=H, bi=bi, D2=D2,
                             unroll=True if T <= 32 else 8)
    return pl.pallas_call(
        kern,
        out_shape=tuple(jax.ShapeDtypeStruct((T, N, H), jnp.float32)
                        for _ in range(bi)),
        in_specs=[_VMEM] * 2,
        out_specs=tuple(_VMEM for _ in range(bi)),
    )(gates, whh_bd)


def bilstm_head_pallas(gates, whh_bd, w1, b1, w2, b2, w3, b3, *, B, multi, D2):
    T = gates.shape[0]
    kern = functools.partial(bilstm_head_kernel, T=T, D2=D2, B=B, multi=multi,
                             unroll=True if T <= 32 else 8)
    return pl.pallas_call(
        kern,
        out_shape=jax.ShapeDtypeStruct((B, w3.shape[1]), jnp.float32),
        in_specs=[_VMEM] * 8,
        out_specs=_VMEM,
    )(gates, whh_bd, w1, b1, w2, b2, w3, b3)


# ----------------------------------------------------------------------------
# Full Net_multi forward (XLA glue: embedding gather + batched gate pre-projection)
# ----------------------------------------------------------------------------
def net_multi_forward(params, input1, input2, input3, *, hidden_dim, num_layers,
                      bi_num, multi):
    H = hidden_dim
    D2 = bi_num * H
    B, T = input1.shape
    assert T >= 1, "max-over-time needs at least one timestep"

    # Stack the three inputs along batch: they share embedding + LSTM weights.
    ids = jnp.concatenate([input1, input2, input3], axis=0)          # (multi*B, T)
    emb = jnp.take(params["embedding"], ids, axis=0)                 # (multi*B, T, E)
    x = jnp.transpose(emb, (1, 0, 2))                                # (T, N, E) time-major

    if bi_num == 2:
        # lane -> direction map for the interleaved gate layout
        is_bwd = ((jnp.arange(4 * D2) // H) % 2) == 1                # (4*D2,)

    out = None
    for layer in range(num_layers):
        wih_c, whh_bd, b_c = params["lstm"][layer]
        # One big MXU-friendly matmul for the input projection (+ bias) of all
        # timesteps & both directions; the serial recurrence only adds h@Whh.
        pre = jnp.einsum('tnd,dg->tng', x, wih_c,
                         preferred_element_type=jnp.float32) + b_c   # (T, N, 4*D2)
        if bi_num == 2:
            # Reverse direction consumes the sequence back-to-front: bake the
            # time reversal into its precomputed gate lanes (tiny tensor; XLA fuses).
            gates = jnp.where(is_bwd, jnp.flip(pre, axis=0), pre)
        else:
            gates = pre

        if layer < num_layers - 1:
            seqs = bilstm_seq_pallas(gates, whh_bd, H=H, bi=bi_num, D2=D2)
            x = jnp.concatenate(seqs, axis=-1) if bi_num == 2 else seqs[0]
        else:
            # Last layer: skip the dead hidden-sequence output; fuse max-pool
            # + concat + MLP head into the same kernel.
            # TODO(synk): nn.Dropout layers are identity here (inference semantics).
            out = bilstm_head_pallas(gates, whh_bd,
                                     params["w1"], params["b1"],
                                     params["w2"], params["b2"],
                                     params["w3"], params["b3"],
                                     B=B, multi=multi, D2=D2)
    return out


# ----------------------------------------------------------------------------
# Deterministic parameter init (shapes follow Net_multi.__init__), pre-fused
# ----------------------------------------------------------------------------
def init_params(key, vocab_size, embedding_num, hidden_dim, num_layers, bi_num, multi):
    E, H = embedding_num, hidden_dim
    D2 = bi_num * H
    n_keys = 1 + num_layers * bi_num * 4 + 3
    keys = jax.random.split(key, n_keys)
    kit = iter(range(n_keys))

    emb = jax.random.normal(keys[next(kit)], (vocab_size, E), jnp.float32)
    emb = emb.at[0].set(0.0)                                  # padding_idx=0

    bound = float(1.0 / (H ** 0.5))

    def u(k, shape):
        return jax.random.uniform(k, shape, jnp.float32, -bound, bound)

    lstm = []
    for layer in range(num_layers):
        in_dim = E if layer == 0 else D2
        wih_dirs, whh_dirs, b_dirs = [], [], []
        for _ in range(bi_num):
            wih = u(keys[next(kit)], (in_dim, 4 * H))   # == weight_ih_l{layer}.T
            whh = u(keys[next(kit)], (H, 4 * H))        # == weight_hh_l{layer}.T
            bih = u(keys[next(kit)], (4 * H,))
            bhh = u(keys[next(kit)], (4 * H,))
            wih_dirs.append(wih)
            whh_dirs.append(whh)
            b_dirs.append((bih + bhh).reshape(1, 4 * H))
        wih_c = _interleave_gate_cols(wih_dirs, H)            # (in_dim, 4*D2)
        b_c = _interleave_gate_cols(b_dirs, H)                # (1, 4*D2)
        whh_bd = _block_diag_whh(whh_dirs, H)                 # (D2, 4*D2)
        lstm.append((wih_c, whh_bd, b_c))

    def linear(kk, fan_in, fan_out):
        b = float(1.0 / (fan_in ** 0.5))
        k1, k2 = jax.random.split(kk)
        w = jax.random.uniform(k1, (fan_in, fan_out), jnp.float32, -b, b)
        bias = jax.random.uniform(k2, (1, fan_out), jnp.float32, -b, b)
        return w, bias

    w1, b1 = linear(keys[next(kit)], multi * D2, 256)
    w2, b2 = linear(keys[next(kit)], 256, 32)
    w3, b3 = linear(keys[next(kit)], 32, 2)

    return {"embedding": emb, "lstm": lstm,
            "w1": w1, "b1": b1, "w2": w2, "b2": b2, "w3": w3, "b3": b3}


# ----------------------------------------------------------------------------
if __name__ == "__main__":
    # Small shapes consistent with the module's forward.
    multi = 3              # forward takes 3 inputs -> 3 pooled features concatenated
    vocab_size = 32
    embedding_num = 16
    hidden_dim = 32
    num_layers = 1
    biFlag = True
    bi_num = 2 if biFlag else 1
    batch, seq_len = 2, 8

    params = init_params(jax.random.PRNGKey(42), vocab_size, embedding_num,
                         hidden_dim, num_layers, bi_num, multi)

    key = jax.random.PRNGKey(0)
    k1, k2, k3 = jax.random.split(key, 3)
    input1 = jax.random.randint(k1, (batch, seq_len), 0, vocab_size, dtype=jnp.int32)
    input2 = jax.random.randint(k2, (batch, seq_len), 0, vocab_size, dtype=jnp.int32)
    input3 = jax.random.randint(k3, (batch, seq_len), 0, vocab_size, dtype=jnp.int32)

    fwd = functools.partial(net_multi_forward, hidden_dim=hidden_dim,
                            num_layers=num_layers, bi_num=bi_num, multi=multi)
    out = jax.jit(fwd)(params, input1, input2, input3)
    out = jax.block_until_ready(out)
    assert out.shape == (batch, 2) and out.dtype == jnp.float32
    assert bool(jnp.all(jnp.isfinite(out)))
    print("KERNEL_OK")
</pallas_src>

<mosaic_0001>
module attributes {stable_mosaic.version = 11 : i64} {
  func.func @bilstm_head_kernel(%arg0: memref<8x6x256xf32, #tpu.memory_space<vmem>>, %arg1: memref<64x256xf32, #tpu.memory_space<vmem>>, %arg2: memref<192x256xf32, #tpu.memory_space<vmem>>, %arg3: memref<1x256xf32, #tpu.memory_space<vmem>>, %arg4: memref<256x32xf32, #tpu.memory_space<vmem>>, %arg5: memref<1x32xf32, #tpu.memory_space<vmem>>, %arg6: memref<32x2xf32, #tpu.memory_space<vmem>>, %arg7: memref<1x2xf32, #tpu.memory_space<vmem>>, %arg8: memref<2x2xf32, #tpu.memory_space<vmem>>) attributes {dimension_semantics = [], scalar_prefetch = 0 : i64, scratch_operands = 0 : i64, tpu.core_type = #tpu.core_type<tc>} {
    %c0 = arith.constant 0 : index
    %c0_0 = arith.constant 0 : index
    %0 = vector.load %arg1[%c0, %c0_0] : memref<64x256xf32, #tpu.memory_space<vmem>>, vector<64x256xf32>
    %cst = arith.constant 0.000000e+00 : f32
    %1 = vector.broadcast %cst : f32 to vector<6x64xf32>
    %cst_1 = arith.constant 0.000000e+00 : f32
    %2 = vector.broadcast %cst_1 : f32 to vector<6x64xf32>
    %cst_2 = arith.constant 0xFF800000 : f32
    %3 = vector.broadcast %cst_2 : f32 to vector<6x64xf32>
    %c0_i32 = arith.constant 0 : i32
    %4 = arith.index_cast %c0_i32 : i32 to index
    %c0_3 = arith.constant 0 : index
    %c0_4 = arith.constant 0 : index
    %5 = vector.load %arg0[%4, %c0_3, %c0_4] : memref<8x6x256xf32, #tpu.memory_space<vmem>>, vector<1x6x256xf32>
    %6 = vector.shape_cast %5 : vector<1x6x256xf32> to vector<6x256xf32>
    %cst_5 = arith.constant dense<0.000000e+00> : vector<6x256xf32>
    %7 = tpu.matmul %1, %0, %cst_5 {dimension_numbers = #tpu.dot_dimension_numbers<[1], [0], [0], [1], [0, 0, 1, 1], [], []>} : vector<6x64xf32>, vector<64x256xf32>, vector<6x256xf32> -> vector<6x256xf32>
    %8 = arith.addf %6, %7 : vector<6x256xf32>
    %9 = arith.negf %8 : vector<6x256xf32>
    %10 = math.exp %9 : vector<6x256xf32>
    %cst_6 = arith.constant 1.000000e+00 : f32
    %11 = vector.broadcast %cst_6 : f32 to vector<6x256xf32>
    %12 = arith.addf %11, %10 : vector<6x256xf32>
    %13 = arith.divf %11, %12 : vector<6x256xf32>
    %14 = vector.extract_strided_slice %13 {offsets = [0, 0], sizes = [6, 64], strides = [1, 1]} : vector<6x256xf32> to vector<6x64xf32>
    %15 = vector.extract_strided_slice %13 {offsets = [0, 64], sizes = [6, 64], strides = [1, 1]} : vector<6x256xf32> to vector<6x64xf32>
    %16 = vector.extract_strided_slice %8 {offsets = [0, 128], sizes = [6, 64], strides = [1, 1]} : vector<6x256xf32> to vector<6x64xf32>
    %17 = math.tanh %16 : vector<6x64xf32>
    %18 = vector.extract_strided_slice %13 {offsets = [0, 192], sizes = [6, 64], strides = [1, 1]} : vector<6x256xf32> to vector<6x64xf32>
    %19 = arith.mulf %15, %2 : vector<6x64xf32>
    %20 = arith.mulf %14, %17 : vector<6x64xf32>
    %21 = arith.addf %19, %20 : vector<6x64xf32>
    %22 = math.tanh %21 : vector<6x64xf32>
    %23 = arith.mulf %18, %22 : vector<6x64xf32>
    %24 = arith.maximumf %3, %23 : vector<6x64xf32>
    %c1_i32 = arith.constant 1 : i32
    %25 = arith.index_cast %c1_i32 : i32 to index
    %c0_7 = arith.constant 0 : index
    %c0_8 = arith.constant 0 : index
    %26 = vector.load %arg0[%25, %c0_7, %c0_8] : memref<8x6x256xf32, #tpu.memory_space<vmem>>, vector<1x6x256xf32>
    %27 = vector.shape_cast %26 : vector<1x6x256xf32> to vector<6x256xf32>
    %cst_9 = arith.constant dense<0.000000e+00> : vector<6x256xf32>
    %28 = tpu.matmul %23, %0, %cst_9 {dimension_numbers = #tpu.dot_dimension_numbers<[1], [0], [0], [1], [0, 0, 1, 1], [], []>} : vector<6x64xf32>, vector<64x256xf32>, vector<6x256xf32> -> vector<6x256xf32>
    %29 = arith.addf %27, %28 : vector<6x256xf32>
    %30 = arith.negf %29 : vector<6x256xf32>
    %31 = math.exp %30 : vector<6x256xf32>
    %cst_10 = arith.constant 1.000000e+00 : f32
    %32 = vector.broadcast %cst_10 : f32 to vector<6x256xf32>
    %33 = arith.addf %32, %31 : vector<6x256xf32>
    %34 = arith.divf %32, %33 : vector<6x256xf32>
    %35 = vector.extract_strided_slice %34 {offsets = [0, 0], sizes = [6, 64], strides = [1, 1]} : vector<6x256xf32> to vector<6x64xf32>
    %36 = vector.extract_strided_slice %34 {offsets = [0, 64], sizes = [6, 64], strides = [1, 1]} : vector<6x256xf32> to vector<6x64xf32>
    %37 = vector.extract_strided_slice %29 {offsets = [0, 128], sizes = [6, 64], strides = [1, 1]} : vector<6x256xf32> to vector<6x64xf32>
    %38 = math.tanh %37 : vector<6x64xf32>
    %39 = vector.extract_strided_slice %34 {offsets = [0, 192], sizes = [6, 64], strides = [1, 1]} : vector<6x256xf32> to vector<6x64xf32>
    %40 = arith.mulf %36, %21 : vector<6x64xf32>
    %41 = arith.mulf %35, %38 : vector<6x64xf32>
    %42 = arith.addf %40, %41 : vector<6x64xf32>
    %43 = math.tanh %42 : vector<6x64xf32>
    %44 = arith.mulf %39, %43 : vector<6x64xf32>
    %45 = arith.maximumf %24, %44 : vector<6x64xf32>
    %c2_i32 = arith.constant 2 : i32
    %46 = arith.index_cast %c2_i32 : i32 to index
    %c0_11 = arith.constant 0 : index
    %c0_12 = arith.constant 0 : index
    %47 = vector.load %arg0[%46, %c0_11, %c0_12] : memref<8x6x256xf32, #tpu.memory_space<vmem>>, vector<1x6x256xf32>
    %48 = vector.shape_cast %47 : vector<1x6x256xf32> to vector<6x256xf32>
    %cst_13 = arith.constant dense<0.000000e+00> : vector<6x256xf32>
    %49 = tpu.matmul %44, %0, %cst_13 {dimension_numbers = #tpu.dot_dimension_numbers<[1], [0], [0], [1], [0, 0, 1, 1], [], []>} : vector<6x64xf32>, vector<64x256xf32>, vector<6x256xf32> -> vector<6x256xf32>
    %50 = arith.addf %48, %49 : vector<6x256xf32>
    %51 = arith.negf %50 : vector<6x256xf32>
    %52 = math.exp %51 : vector<6x256xf32>
    %cst_14 = arith.constant 1.000000e+00 : f32
    %53 = vector.broadcast %cst_14 : f32 to vector<6x256xf32>
    %54 = arith.addf %53, %52 : vector<6x256xf32>
    %55 = arith.divf %53, %54 : vector<6x256xf32>
    %56 = vector.extract_strided_slice %55 {offsets = [0, 0], sizes = [6, 64], strides = [1, 1]} : vector<6x256xf32> to vector<6x64xf32>
    %57 = vector.extract_strided_slice %55 {offsets = [0, 64], sizes = [6, 64], strides = [1, 1]} : vector<6x256xf32> to vector<6x64xf32>
    %58 = vector.extract_strided_slice %50 {offsets = [0, 128], sizes = [6, 64], strides = [1, 1]} : vector<6x256xf32> to vector<6x64xf32>
    %59 = math.tanh %58 : vector<6x64xf32>
    %60 = vector.extract_strided_slice %55 {offsets = [0, 192], sizes = [6, 64], strides = [1, 1]} : vector<6x256xf32> to vector<6x64xf32>
    %61 = arith.mulf %57, %42 : vector<6x64xf32>
    %62 = arith.mulf %56, %59 : vector<6x64xf32>
    %63 = arith.addf %61, %62 : vector<6x64xf32>
    %64 = math.tanh %63 : vector<6x64xf32>
    %65 = arith.mulf %60, %64 : vector<6x64xf32>
    %66 = arith.maximumf %45, %65 : vector<6x64xf32>
    %c3_i32 = arith.constant 3 : i32
    %67 = arith.index_cast %c3_i32 : i32 to index
    %c0_15 = arith.constant 0 : index
    %c0_16 = arith.constant 0 : index
    %68 = vector.load %arg0[%67, %c0_15, %c0_16] : memref<8x6x256xf32, #tpu.memory_space<vmem>>, vector<1x6x256xf32>
    %69 = vector.shape_cast %68 : vector<1x6x256xf32> to vector<6x256xf32>
    %cst_17 = arith.constant dense<0.000000e+00> : vector<6x256xf32>
    %70 = tpu.matmul %65, %0, %cst_17 {dimension_numbers = #tpu.dot_dimension_numbers<[1], [0], [0], [1], [0, 0, 1, 1], [], []>} : vector<6x64xf32>, vector<64x256xf32>, vector<6x256xf32> -> vector<6x256xf32>
    %71 = arith.addf %69, %70 : vector<6x256xf32>
    %72 = arith.negf %71 : vector<6x256xf32>
    %73 = math.exp %72 : vector<6x256xf32>
    %cst_18 = arith.constant 1.000000e+00 : f32
    %74 = vector.broadcast %cst_18 : f32 to vector<6x256xf32>
    %75 = arith.addf %74, %73 : vector<6x256xf32>
    %76 = arith.divf %74, %75 : vector<6x256xf32>
    %77 = vector.extract_strided_slice %76 {offsets = [0, 0], sizes = [6, 64], strides = [1, 1]} : vector<6x256xf32> to vector<6x64xf32>
    %78 = vector.extract_strided_slice %76 {offsets = [0, 64], sizes = [6, 64], strides = [1, 1]} : vector<6x256xf32> to vector<6x64xf32>
    %79 = vector.extract_strided_slice %71 {offsets = [0, 128], sizes = [6, 64], strides = [1, 1]} : vector<6x256xf32> to vector<6x64xf32>
    %80 = math.tanh %79 : vector<6x64xf32>
    %81 = vector.extract_strided_slice %76 {offsets = [0, 192], sizes = [6, 64], strides = [1, 1]} : vector<6x256xf32> to vector<6x64xf32>
    %82 = arith.mulf %78, %63 : vector<6x64xf32>
    %83 = arith.mulf %77, %80 : vector<6x64xf32>
    %84 = arith.addf %82, %83 : vector<6x64xf32>
    %85 = math.tanh %84 : vector<6x64xf32>
    %86 = arith.mulf %81, %85 : vector<6x64xf32>
    %87 = arith.maximumf %66, %86 : vector<6x64xf32>
    %c4_i32 = arith.constant 4 : i32
    %88 = arith.index_cast %c4_i32 : i32 to index
    %c0_19 = arith.constant 0 : index
    %c0_20 = arith.constant 0 : index
    %89 = vector.load %arg0[%88, %c0_19, %c0_20] : memref<8x6x256xf32, #tpu.memory_space<vmem>>, vector<1x6x256xf32>
    %90 = vector.shape_cast %89 : vector<1x6x256xf32> to vector<6x256xf32>
    %cst_21 = arith.constant dense<0.000000e+00> : vector<6x256xf32>
    %91 = tpu.matmul %86, %0, %cst_21 {dimension_numbers = #tpu.dot_dimension_numbers<[1], [0], [0], [1], [0, 0, 1, 1], [], []>} : vector<6x64xf32>, vector<64x256xf32>, vector<6x256xf32> -> vector<6x256xf32>
    %92 = arith.addf %90, %91 : vector<6x256xf32>
    %93 = arith.negf %92 : vector<6x256xf32>
    %94 = math.exp %93 : vector<6x256xf32>
    %cst_22 = arith.constant 1.000000e+00 : f32
    %95 = vector.broadcast %cst_22 : f32 to vector<6x256xf32>
    %96 = arith.addf %95, %94 : vector<6x256xf32>
    %97 = arith.divf %95, %96 : vector<6x256xf32>
    %98 = vector.extract_strided_slice %97 {offsets = [0, 0], sizes = [6, 64], strides = [1, 1]} : vector<6x256xf32> to vector<6x64xf32>
    %99 = vector.extract_strided_slice %97 {offsets = [0, 64], sizes = [6, 64], strides = [1, 1]} : vector<6x256xf32> to vector<6x64xf32>
    %100 = vector.extract_strided_slice %92 {offsets = [0, 128], sizes = [6, 64], strides = [1, 1]} : vector<6x256xf32> to vector<6x64xf32>
    %101 = math.tanh %100 : vector<6x64xf32>
    %102 = vector.extract_strided_slice %97 {offsets = [0, 192], sizes = [6, 64], strides = [1, 1]} : vector<6x256xf32> to vector<6x64xf32>
    %103 = arith.mulf %99, %84 : vector<6x64xf32>
    %104 = arith.mulf %98, %101 : vector<6x64xf32>
    %105 = arith.addf %103, %104 : vector<6x64xf32>
    %106 = math.tanh %105 : vector<6x64xf32>
    %107 = arith.mulf %102, %106 : vector<6x64xf32>
    %108 = arith.maximumf %87, %107 : vector<6x64xf32>
    %c5_i32 = arith.constant 5 : i32
    %109 = arith.index_cast %c5_i32 : i32 to index
    %c0_23 = arith.constant 0 : index
    %c0_24 = arith.constant 0 : index
    %110 = vector.load %arg0[%109, %c0_23, %c0_24] : memref<8x6x256xf32, #tpu.memory_space<vmem>>, vector<1x6x256xf32>
    %111 = vector.shape_cast %110 : vector<1x6x256xf32> to vector<6x256xf32>
    %cst_25 = arith.constant dense<0.000000e+00> : vector<6x256xf32>
    %112 = tpu.matmul %107, %0, %cst_25 {dimension_numbers = #tpu.dot_dimension_numbers<[1], [0], [0], [1], [0, 0, 1, 1], [], []>} : vector<6x64xf32>, vector<64x256xf32>, vector<6x256xf32> -> vector<6x256xf32>
    %113 = arith.addf %111, %112 : vector<6x256xf32>
    %114 = arith.negf %113 : vector<6x256xf32>
    %115 = math.exp %114 : vector<6x256xf32>
    %cst_26 = arith.constant 1.000000e+00 : f32
    %116 = vector.broadcast %cst_26 : f32 to vector<6x256xf32>
    %117 = arith.addf %116, %115 : vector<6x256xf32>
    %118 = arith.divf %116, %117 : vector<6x256xf32>
    %119 = vector.extract_strided_slice %118 {offsets = [0, 0], sizes = [6, 64], strides = [1, 1]} : vector<6x256xf32> to vector<6x64xf32>
    %120 = vector.extract_strided_slice %118 {offsets = [0, 64], sizes = [6, 64], strides = [1, 1]} : vector<6x256xf32> to vector<6x64xf32>
    %121 = vector.extract_strided_slice %113 {offsets = [0, 128], sizes = [6, 64], strides = [1, 1]} : vector<6x256xf32> to vector<6x64xf32>
    %122 = math.tanh %121 : vector<6x64xf32>
    %123 = vector.extract_strided_slice %118 {offsets = [0, 192], sizes = [6, 64], strides = [1, 1]} : vector<6x256xf32> to vector<6x64xf32>
    %124 = arith.mulf %120, %105 : vector<6x64xf32>
    %125 = arith.mulf %119, %122 : vector<6x64xf32>
    %126 = arith.addf %124, %125 : vector<6x64xf32>
    %127 = math.tanh %126 : vector<6x64xf32>
    %128 = arith.mulf %123, %127 : vector<6x64xf32>
    %129 = arith.maximumf %108, %128 : vector<6x64xf32>
    %c6_i32 = arith.constant 6 : i32
    %130 = arith.index_cast %c6_i32 : i32 to index
    %c0_27 = arith.constant 0 : index
    %c0_28 = arith.constant 0 : index
    %131 = vector.load %arg0[%130, %c0_27, %c0_28] : memref<8x6x256xf32, #tpu.memory_space<vmem>>, vector<1x6x256xf32>
    %132 = vector.shape_cast %131 : vector<1x6x256xf32> to vector<6x256xf32>
    %cst_29 = arith.constant dense<0.000000e+00> : vector<6x256xf32>
    %133 = tpu.matmul %128, %0, %cst_29 {dimension_numbers = #tpu.dot_dimension_numbers<[1], [0], [0], [1], [0, 0, 1, 1], [], []>} : vector<6x64xf32>, vector<64x256xf32>, vector<6x256xf32> -> vector<6x256xf32>
    %134 = arith.addf %132, %133 : vector<6x256xf32>
    %135 = arith.negf %134 : vector<6x256xf32>
    %136 = math.exp %135 : vector<6x256xf32>
    %cst_30 = arith.constant 1.000000e+00 : f32
    %137 = vector.broadcast %cst_30 : f32 to vector<6x256xf32>
    %138 = arith.addf %137, %136 : vector<6x256xf32>
    %139 = arith.divf %137, %138 : vector<6x256xf32>
    %140 = vector.extract_strided_slice %139 {offsets = [0, 0], sizes = [6, 64], strides = [1, 1]} : vector<6x256xf32> to vector<6x64xf32>
    %141 = vector.extract_strided_slice %139 {offsets = [0, 64], sizes = [6, 64], strides = [1, 1]} : vector<6x256xf32> to vector<6x64xf32>
    %142 = vector.extract_strided_slice %134 {offsets = [0, 128], sizes = [6, 64], strides = [1, 1]} : vector<6x256xf32> to vector<6x64xf32>
    %143 = math.tanh %142 : vector<6x64xf32>
    %144 = vector.extract_strided_slice %139 {offsets = [0, 192], sizes = [6, 64], strides = [1, 1]} : vector<6x256xf32> to vector<6x64xf32>
    %145 = arith.mulf %141, %126 : vector<6x64xf32>
    %146 = arith.mulf %140, %143 : vector<6x64xf32>
    %147 = arith.addf %145, %146 : vector<6x64xf32>
    %148 = math.tanh %147 : vector<6x64xf32>
    %149 = arith.mulf %144, %148 : vector<6x64xf32>
    %150 = arith.maximumf %129, %149 : vector<6x64xf32>
    %c7_i32 = arith.constant 7 : i32
    %151 = arith.index_cast %c7_i32 : i32 to index
    %c0_31 = arith.constant 0 : index
    %c0_32 = arith.constant 0 : index
    %152 = vector.load %arg0[%151, %c0_31, %c0_32] : memref<8x6x256xf32, #tpu.memory_space<vmem>>, vector<1x6x256xf32>
    %153 = vector.shape_cast %152 : vector<1x6x256xf32> to vector<6x256xf32>
    %cst_33 = arith.constant dense<0.000000e+00> : vector<6x256xf32>
    %154 = tpu.matmul %149, %0, %cst_33 {dimension_numbers = #tpu.dot_dimension_numbers<[1], [0], [0], [1], [0, 0, 1, 1], [], []>} : vector<6x64xf32>, vector<64x256xf32>, vector<6x256xf32> -> vector<6x256xf32>
    %155 = arith.addf %153, %154 : vector<6x256xf32>
    %156 = arith.negf %155 : vector<6x256xf32>
    %157 = math.exp %156 : vector<6x256xf32>
    %cst_34 = arith.constant 1.000000e+00 : f32
    %158 = vector.broadcast %cst_34 : f32 to vector<6x256xf32>
    %159 = arith.addf %158, %157 : vector<6x256xf32>
    %160 = arith.divf %158, %159 : vector<6x256xf32>
    %161 = vector.extract_strided_slice %160 {offsets = [0, 0], sizes = [6, 64], strides = [1, 1]} : vector<6x256xf32> to vector<6x64xf32>
    %162 = vector.extract_strided_slice %160 {offsets = [0, 64], sizes = [6, 64], strides = [1, 1]} : vector<6x256xf32> to vector<6x64xf32>
    %163 = vector.extract_strided_slice %155 {offsets = [0, 128], sizes = [6, 64], strides = [1, 1]} : vector<6x256xf32> to vector<6x64xf32>
    %164 = math.tanh %163 : vector<6x64xf32>
    %165 = vector.extract_strided_slice %160 {offsets = [0, 192], sizes = [6, 64], strides = [1, 1]} : vector<6x256xf32> to vector<6x64xf32>
    %166 = arith.mulf %162, %147 : vector<6x64xf32>
    %167 = arith.mulf %161, %164 : vector<6x64xf32>
    %168 = arith.addf %166, %167 : vector<6x64xf32>
    %169 = math.tanh %168 : vector<6x64xf32>
    %170 = arith.mulf %165, %169 : vector<6x64xf32>
    %171 = arith.maximumf %150, %170 : vector<6x64xf32>
    %c8_i32 = arith.constant 8 : i32
    %172 = vector.extract_strided_slice %171 {offsets = [0, 0], sizes = [2, 64], strides = [1, 1]} : vector<6x64xf32> to vector<2x64xf32>
    %173 = vector.extract_strided_slice %171 {offsets = [2, 0], sizes = [2, 64], strides = [1, 1]} : vector<6x64xf32> to vector<2x64xf32>
    %174 = vector.extract_strided_slice %171 {offsets = [4, 0], sizes = [2, 64], strides = [1, 1]} : vector<6x64xf32> to vector<2x64xf32>
    %175 = tpu.concatenate %172, %173, %174 in 1 : vector<2x64xf32>, vector<2x64xf32>, vector<2x64xf32> -> vector<2x192xf32>
    %c0_35 = arith.constant 0 : index
    %c0_36 = arith.constant 0 : index
    %176 = vector.load %arg2[%c0_35, %c0_36] : memref<192x256xf32, #tpu.memory_space<vmem>>, vector<192x256xf32>
    %cst_37 = arith.constant dense<0.000000e+00> : vector<2x256xf32>
    %177 = tpu.matmul %175, %176, %cst_37 {dimension_numbers = #tpu.dot_dimension_numbers<[1], [0], [0], [1], [0, 0, 1, 1], [], []>} : vector<2x192xf32>, vector<192x256xf32>, vector<2x256xf32> -> vector<2x256xf32>
    %c0_38 = arith.constant 0 : index
    %c0_39 = arith.constant 0 : index
    %178 = vector.load %arg3[%c0_38, %c0_39] : memref<1x256xf32, #tpu.memory_space<vmem>>, vector<1x256xf32>
    %179 = vector.broadcast %178 : vector<1x256xf32> to vector<2x256xf32>
    %180 = arith.addf %177, %179 : vector<2x256xf32>
    %cst_40 = arith.constant 0.000000e+00 : f32
    %181 = vector.broadcast %cst_40 : f32 to vector<2x256xf32>
    %182 = arith.maximumf %180, %181 : vector<2x256xf32>
    %c0_41 = arith.constant 0 : index
    %c0_42 = arith.constant 0 : index
    %183 = vector.load %arg4[%c0_41, %c0_42] : memref<256x32xf32, #tpu.memory_space<vmem>>, vector<256x32xf32>
    %cst_43 = arith.constant dense<0.000000e+00> : vector<2x32xf32>
    %184 = tpu.matmul %182, %183, %cst_43 {dimension_numbers = #tpu.dot_dimension_numbers<[1], [0], [0], [1], [0, 0, 1, 1], [], []>} : vector<2x256xf32>, vector<256x32xf32>, vector<2x32xf32> -> vector<2x32xf32>
    %c0_44 = arith.constant 0 : index
    %c0_45 = arith.constant 0 : index
    %185 = vector.load %arg5[%c0_44, %c0_45] : memref<1x32xf32, #tpu.memory_space<vmem>>, vector<1x32xf32>
    %186 = vector.broadcast %185 : vector<1x32xf32> to vector<2x32xf32>
    %187 = arith.addf %184, %186 : vector<2x32xf32>
    %cst_46 = arith.constant 0.000000e+00 : f32
    %188 = vector.broadcast %cst_46 : f32 to vector<2x32xf32>
    %189 = arith.maximumf %187, %188 : vector<2x32xf32>
    %c0_47 = arith.constant 0 : index
    %c0_48 = arith.constant 0 : index
    %190 = vector.load %arg6[%c0_47, %c0_48] : memref<32x2xf32, #tpu.memory_space<vmem>>, vector<32x2xf32>
    %cst_49 = arith.constant dense<0.000000e+00> : vector<2x2xf32>
    %191 = tpu.matmul %189, %190, %cst_49 {dimension_numbers = #tpu.dot_dimension_numbers<[1], [0], [0], [1], [0, 0, 1, 1], [], []>} : vector<2x32xf32>, vector<32x2xf32>, vector<2x2xf32> -> vector<2x2xf32>
    %c0_50 = arith.constant 0 : index
    %c0_51 = arith.constant 0 : index
    %192 = vector.load %arg7[%c0_50, %c0_51] : memref<1x2xf32, #tpu.memory_space<vmem>>, vector<1x2xf32>
    %193 = vector.broadcast %192 : vector<1x2xf32> to vector<2x2xf32>
    %194 = arith.addf %191, %193 : vector<2x2xf32>
    %c0_52 = arith.constant 0 : index
    %c0_53 = arith.constant 0 : index
    %195 = vector.load %arg8[%c0_52, %c0_53] : memref<2x2xf32, #tpu.memory_space<vmem>>, vector<2x2xf32>
    tpu.vector_store %arg8[%c0_52, %c0_53], %194 {strides = array<i32>} : memref<2x2xf32, #tpu.memory_space<vmem>>, vector<2x2xf32>,
    return
  }
}

</mosaic_0001>

<llo_original>
// kernel: net_multi_forward.1
$region0: #{net_multi_forward.1}
  #allocation0 [shape = 'u32[]', space=smem, size = 0x4, offset = 0x4, fixed_abs, tag = 'smem constant byte address 0x4 - core index']
  #allocation1 [shape = 'u32[72,128]{1,0:T(1,128)}', space=vmem, size = 0x9000, scoped, tag = 'internal scratch']
  %s0 = inlined_call_operand.vmem [shape: f32[8,6,256], index: 0, kind: input, shape index: {}]
  %s1 = inlined_call_operand.vmem [shape: f32[64,256], index: 1, kind: input, shape index: {}]
  %s2 = inlined_call_operand.vmem [shape: f32[192,256], index: 2, kind: input, shape index: {}]
  %s3 = inlined_call_operand.vmem [shape: f32[1,256], index: 3, kind: input, shape index: {}]
  %s4 = inlined_call_operand.vmem [shape: f32[256,32], index: 4, kind: input, shape index: {}]
  %s5 = inlined_call_operand.vmem [shape: f32[1,32], index: 5, kind: input, shape index: {}]
  %s6 = inlined_call_operand.vmem [shape: f32[32,2], index: 6, kind: input, shape index: {}]
  %s7 = inlined_call_operand.vmem [shape: f32[1,2], index: 7, kind: input, shape index: {}]
  %s8 = inlined_call_operand.hbm [shape: f32[2,2], index: 8, kind: output, shape index: {}]
  %s9 = sld [smem:[#allocation0]]
  $region42: #{net_multi_forward.1} parent=0
    _
  %s11 = ssub.s32 1, %s9
  %s12 = scalar_select 0, %s11, %s9
  $region1: #{net_multi_forward.1} parent=0
    #allocation2 [shape = 'u8[1024]{0}', space=vmem, size = 0x400, scoped, tag = 'output window, operand 0, single buffered']
    #allocation3 [shape = 's32[1]{0}', space=sflag, size = 0x4, scoped, tag = 'scoped memory for net_multi_forward.1']
    %13 = vsyncpa [#allocation3], 0
    // Predicated region
    $region2: #{net_multi_forward.1} parent=1 // pred_check
      _
    $region3: #{net_multi_forward.1} parent=1 // pred_check_branch
      %15 = sbr.rel (0) target = $region5
    $region4: #{net_multi_forward.1} parent=1 // pred_region
      _
    $region5: #{net_multi_forward.1} parent=1 // pred_fallthru
      _
    // Predicated region
    $region6: #{net_multi_forward.1} parent=1 // pred_check
      _
    $region7: #{net_multi_forward.1} parent=1 // pred_check_branch
      %17 = sbr.rel (0) target = $region9
    $region8: #{net_multi_forward.1} parent=1 // pred_region
      _
    $region9: #{net_multi_forward.1} parent=1 // pred_fallthru
      _
    // Predicated region
    $region10: #{net_multi_forward.1} parent=1 // pred_check
      _
    $region11: #{net_multi_forward.1} parent=1 // pred_check_branch
      %19 = sbr.rel (0) target = $region13
    $region12: #{net_multi_forward.1} parent=1 // pred_region
      _
    $region13: #{net_multi_forward.1} parent=1 // pred_fallthru
      _
    // Predicated region
    $region14: #{net_multi_forward.1} parent=1 // pred_check
      _
    $region15: #{net_multi_forward.1} parent=1 // pred_check_branch
      %21 = sbr.rel (0) target = $region17
    $region16: #{net_multi_forward.1} parent=1 // pred_region
      _
    $region17: #{net_multi_forward.1} parent=1 // pred_fallthru
      _
    // Predicated region
    $region18: #{net_multi_forward.1} parent=1 // pred_check
      _
    $region19: #{net_multi_forward.1} parent=1 // pred_check_branch
      %23 = sbr.rel (0) target = $region21
    $region20: #{net_multi_forward.1} parent=1 // pred_region
      _
    $region21: #{net_multi_forward.1} parent=1 // pred_fallthru
      _
    // Predicated region
    $region22: #{net_multi_forward.1} parent=1 // pred_check
      _
    $region23: #{net_multi_forward.1} parent=1 // pred_check_branch
      %25 = sbr.rel (0) target = $region25
    $region24: #{net_multi_forward.1} parent=1 // pred_region
      _
    $region25: #{net_multi_forward.1} parent=1 // pred_fallthru
      _
    // Predicated region
    $region26: #{net_multi_forward.1} parent=1 // pred_check
      _
    $region27: #{net_multi_forward.1} parent=1 // pred_check_branch
      %27 = sbr.rel (0) target = $region29
    $region28: #{net_multi_forward.1} parent=1 // pred_region
      _
    $region29: #{net_multi_forward.1} parent=1 // pred_fallthru
      _
    // Predicated region
    $region30: #{net_multi_forward.1} parent=1 // pred_check
      _
    $region31: #{net_multi_forward.1} parent=1 // pred_check_branch
      %29 = sbr.rel (0) target = $region33
    $region32: #{net_multi_forward.1} parent=1 // pred_region
      _
    $region33: #{net_multi_forward.1} parent=1 // pred_fallthru
      _
    %v30 = vld [vmem:[%s1] sm:$0xff]
    %v31 = vld [vmem:[%s1 + $0x8] sm:$0xff]
    %v32 = vld [vmem:[%s1 + $0x10] sm:$0xff]
    %v33 = vld [vmem:[%s1 + $0x18] sm:$0xff]
    %v34 = vld [vmem:[%s1 + $0x20] sm:$0xff]
    %v35 = vld [vmem:[%s1 + $0x28] sm:$0xff]
    %v36 = vld [vmem:[%s1 + $0x30] sm:$0xff]
    %v37 = vld [vmem:[%s1 + $0x38] sm:$0xff]
    %v38 = vld [vmem:[%s1 + $0x40] sm:$0xff]
    %v39 = vld [vmem:[%s1 + $0x48] sm:$0xff]
    %v40 = vld [vmem:[%s1 + $0x50] sm:$0xff]
    %v41 = vld [vmem:[%s1 + $0x58] sm:$0xff]
    %v42 = vld [vmem:[%s1 + $0x60] sm:$0xff]
    %v43 = vld [vmem:[%s1 + $0x68] sm:$0xff]
    %v44 = vld [vmem:[%s1 + $0x70] sm:$0xff]
    %v45 = vld [vmem:[%s1 + $0x78] sm:$0xff]
    %v46 = vld [vmem:[%s0] sm:$0x3f]
    %v47 = vld [vmem:[%s0 + $0x8] sm:$0x3f]
    %vm48 = vcmask 523264
    %v50 = vsel %vm48, 0.0, 0
    %52 = vmatpush.msra.mxu0 0.0
    %53 = vmatpush.msra.mxu0 0.0
    %54 = vmatpush.msra.mxu0 0.0
    %55 = vmatpush.msra.mxu0 0.0
    %56 = vmatpush.msra.mxu0 0.0
    %57 = vmatpush.msra.mxu0 0.0
    %58 = vmatpush.msra.mxu0 0.0
    %59 = vmatpush.msra.mxu0 0.0
    %60 = vmatpush.msra.mxu0 %v44
    %61 = vmatpush.msra.mxu0 %v42
    %62 = vmatpush.msra.mxu0 %v40
    %63 = vmatpush.msra.mxu0 %v38
    %64 = vmatpush.msra.mxu0 %v36
    %65 = vmatpush.msra.mxu0 %v34
    %66 = vmatpush.msra.mxu0 %v32
    %67 = vmatpush.msra.mxu0 %v30
    %68 = vmatmul.f32.gmra.mxu0 %v50
    %v69 = vpop.f32.mrf.mxu0
    %v70 = vadd.f32 0.0, %v69
    %71 = vdwg.mxu0
    %72 = vmatpush.msra.mxu0 0.0
    %73 = vmatpush.msra.mxu0 0.0
    %74 = vmatpush.msra.mxu0 0.0
    %75 = vmatpush.msra.mxu0 0.0
    %76 = vmatpush.msra.mxu0 0.0
    %77 = vmatpush.msra.mxu0 0.0
    %78 = vmatpush.msra.mxu0 0.0
    %79 = vmatpush.msra.mxu0 0.0
    %80 = vmatpush.msra.mxu0 %v45
    %81 = vmatpush.msra.mxu0 %v43
    %82 = vmatpush.msra.mxu0 %v41
    %83 = vmatpush.msra.mxu0 %v39
    %84 = vmatpush.msra.mxu0 %v37
    %85 = vmatpush.msra.mxu0 %v35
    %86 = vmatpush.msra.mxu0 %v33
    %87 = vmatpush.msra.mxu0 %v31
    %88 = vmatmul.f32.gmra.mxu0 %v50
    %v89 = vpop.f32.mrf.mxu0
    %v90 = vadd.f32 0.0, %v89
    %91 = vdwg.mxu0
    %v92 = vadd.f32 %v46, %v70
    %v93 = vadd.f32 %v47, %v90
    %v94 = vxor.u32 %v92, 2147483648
    %v95 = vxor.u32 %v93, 2147483648
    %v96 = vmul.f32 %v94, 1.442695
    %v97 = vpow.pop %v96
    %v98 = vmul.f32 %v95, 1.442695
    %v99 = vpow.pop %v98
    %v100 = vadd.f32 %v97, 1.0
    %v101 = vadd.f32 %v99, 1.0
    %v102 = vrcp.pop %v100
    %v103 = vmul.f32 %v100, %v102
    %v104 = vsub.f32 1.0, %v103
    %v105 = vmul.f32 %v102, %v104
    %v106 = vadd.f32 %v102, %v105
    %vm107 = vweird.f32 %v100
    %vm108 = vweird.f32 %v102
    %vm109 = vmor %vm107, %vm108
    %v110 = vsel %vm109, %v102, %v106
    %v111 = vand.u32 2147483647, %v100
    %vm112 = vcmp.eq.f32.partialorder %v111, 8.507059e+37
    %v113 = vand.u32 %v100, 2147483648
    %v114 = vor.u32 1.1754944e-38, %v113
    %v115 = vsel %vm112, %v114, %v110
    %v116 = vmul.f32 1.0, %v115
    %v117 = vrcp.pop %v101
    %v118 = vmul.f32 %v101, %v117
    %v119 = vsub.f32 1.0, %v118
    %v120 = vmul.f32 %v117, %v119
    %v121 = vadd.f32 %v117, %v120
    %vm122 = vweird.f32 %v101
    %vm123 = vweird.f32 %v117
    %vm124 = vmor %vm122, %vm123
    %v125 = vsel %vm124, %v117, %v121
    %v126 = vand.u32 2147483647, %v101
    %vm127 = vcmp.eq.f32.partialorder %v126, 8.507059e+37
    %v128 = vand.u32 %v101, 2147483648
    %v129 = vor.u32 1.1754944e-38, %v128
    %v130 = vsel %vm127, %v129, %v125
    %v131 = vmul.f32 1.0, %v130
    %v132 = vtanh.pop %v93
    %v133 = vmul.f32 %v116, 0.0
    %v134 = vmul.f32 %v116, %v132
    %136 = vrot.lane.b32.xlu0 %v134, 64
    %v137 = vpop.permute.xlu0 %136
    %v139 = vadd.f32 %v133, %v137
    %v140 = vtanh.pop %v139
    %v141 = vmul.f32 %v131, %v140
    %s142 = scalar_lea.vmem %s0, 16
    %v143 = vld [vmem:[%s142] sm:$0x3f]
    %v144 = vld [vmem:[%s142 + $0x8] sm:$0x3f]
    %146 = vrot.lane.b32.xlu0 %v141, 64
    %v147 = vpop.permute.xlu0 %146
    %v148 = vsel %vm48, %v147, 0
    %150 = vmatpush.msra.mxu0 0.0
    %151 = vmatpush.msra.mxu0 0.0
    %152 = vmatpush.msra.mxu0 0.0
    %153 = vmatpush.msra.mxu0 0.0
    %154 = vmatpush.msra.mxu0 0.0
    %155 = vmatpush.msra.mxu0 0.0
    %156 = vmatpush.msra.mxu0 0.0
    %157 = vmatpush.msra.mxu0 0.0
    %158 = vmatpush.msra.mxu0 %v44
    %159 = vmatpush.msra.mxu0 %v42
    %160 = vmatpush.msra.mxu0 %v40
    %161 = vmatpush.msra.mxu0 %v38
    %162 = vmatpush.msra.mxu0 %v36
    %163 = vmatpush.msra.mxu0 %v34
    %164 = vmatpush.msra.mxu0 %v32
    %165 = vmatpush.msra.mxu0 %v30
    %166 = vmatmul.f32.gmra.mxu0 %v148
    %v167 = vpop.f32.mrf.mxu0
    %v168 = vadd.f32 0.0, %v167
    %169 = vdwg.mxu0
    %170 = vmatpush.msra.mxu0 0.0
    %171 = vmatpush.msra.mxu0 0.0
    %172 = vmatpush.msra.mxu0 0.0
    %173 = vmatpush.msra.mxu0 0.0
    %174 = vmatpush.msra.mxu0 0.0
    %175 = vmatpush.msra.mxu0 0.0
    %176 = vmatpush.msra.mxu0 0.0
    %177 = vmatpush.msra.mxu0 0.0
    %178 = vmatpush.msra.mxu0 %v45
    %179 = vmatpush.msra.mxu0 %v43
    %180 = vmatpush.msra.mxu0 %v41
    %181 = vmatpush.msra.mxu0 %v39
    %182 = vmatpush.msra.mxu0 %v37
    %183 = vmatpush.msra.mxu0 %v35
    %184 = vmatpush.msra.mxu0 %v33
    %185 = vmatpush.msra.mxu0 %v31
    %186 = vmatmul.f32.gmra.mxu0 %v148
    %v187 = vpop.f32.mrf.mxu0
    %v188 = vadd.f32 0.0, %v187
    %189 = vdwg.mxu0
    %v190 = vadd.f32 %v143, %v168
    %v191 = vadd.f32 %v144, %v188
    %v192 = vxor.u32 %v190, 2147483648
    %v193 = vxor.u32 %v191, 2147483648
    %v194 = vmul.f32 %v192, 1.442695
    %v195 = vpow.pop %v194
    %v196 = vmul.f32 %v193, 1.442695
    %v197 = vpow.pop %v196
    %v198 = vadd.f32 %v195, 1.0
    %v199 = vadd.f32 %v197, 1.0
    %v200 = vrcp.pop %v198
    %v201 = vmul.f32 %v198, %v200
    %v202 = vsub.f32 1.0, %v201
    %v203 = vmul.f32 %v200, %v202
    %v204 = vadd.f32 %v200, %v203
    %vm205 = vweird.f32 %v198
    %vm206 = vweird.f32 %v200
    %vm207 = vmor %vm205, %vm206
    %v208 = vsel %vm207, %v200, %v204
    %v209 = vand.u32 2147483647, %v198
    %vm210 = vcmp.eq.f32.partialorder %v209, 8.507059e+37
    %v211 = vand.u32 %v198, 2147483648
    %v212 = vor.u32 1.1754944e-38, %v211
    %v213 = vsel %vm210, %v212, %v208
    %v214 = vmul.f32 1.0, %v213
    %v215 = vrcp.pop %v199
    %v216 = vmul.f32 %v199, %v215
    %v217 = vsub.f32 1.0, %v216
    %v218 = vmul.f32 %v215, %v217
    %v219 = vadd.f32 %v215, %v218
    %vm220 = vweird.f32 %v199
    %vm221 = vweird.f32 %v215
    %vm222 = vmor %vm220, %vm221
    %v223 = vsel %vm222, %v215, %v219
    %v224 = vand.u32 2147483647, %v199
    %vm225 = vcmp.eq.f32.partialorder %v224, 8.507059e+37
    %v226 = vand.u32 %v199, 2147483648
    %v227 = vor.u32 1.1754944e-38, %v226
    %v228 = vsel %vm225, %v227, %v223
    %v229 = vmul.f32 1.0, %v228
    %v230 = vtanh.pop %v191
    %v231 = vmul.f32 %v214, %v139
    %v232 = vmul.f32 %v214, %v230
    %234 = vrot.lane.b32.xlu0 %v232, 64
    %v235 = vpop.permute.xlu0 %234
    %v237 = vadd.f32 %v231, %v235
    %v238 = vtanh.pop %v237
    %v239 = vmul.f32 %v229, %v238
    %v240 = vmax.f32 %v141, %v239
    %s241 = scalar_lea.vmem %s0, 32
    %v242 = vld [vmem:[%s241] sm:$0x3f]
    %v243 = vld [vmem:[%s241 + $0x8] sm:$0x3f]
    %245 = vrot.lane.b32.xlu0 %v239, 64
    %v246 = vpop.permute.xlu0 %245
    %v247 = vsel %vm48, %v246, 0
    %249 = vmatpush.msra.mxu0 0.0
    %250 = vmatpush.msra.mxu0 0.0
    %251 = vmatpush.msra.mxu0 0.0
    %252 = vmatpush.msra.mxu0 0.0
    %253 = vmatpush.msra.mxu0 0.0
    %254 = vmatpush.msra.mxu0 0.0
    %255 = vmatpush.msra.mxu0 0.0
    %256 = vmatpush.msra.mxu0 0.0
    %257 = vmatpush.msra.mxu0 %v44
    %258 = vmatpush.msra.mxu0 %v42
    %259 = vmatpush.msra.mxu0 %v40
    %260 = vmatpush.msra.mxu0 %v38
    %261 = vmatpush.msra.mxu0 %v36
    %262 = vmatpush.msra.mxu0 %v34
    %263 = vmatpush.msra.mxu0 %v32
    %264 = vmatpush.msra.mxu0 %v30
    %265 = vmatmul.f32.gmra.mxu0 %v247
    %v266 = vpop.f32.mrf.mxu0
    %v267 = vadd.f32 0.0, %v266
    %268 = vdwg.mxu0
    %269 = vmatpush.msra.mxu0 0.0
    %270 = vmatpush.msra.mxu0 0.0
    %271 = vmatpush.msra.mxu0 0.0
    %272 = vmatpush.msra.mxu0 0.0
    %273 = vmatpush.msra.mxu0 0.0
    %274 = vmatpush.msra.mxu0 0.0
    %275 = vmatpush.msra.mxu0 0.0
    %276 = vmatpush.msra.mxu0 0.0
    %277 = vmatpush.msra.mxu0 %v45
    %278 = vmatpush.msra.mxu0 %v43
    %279 = vmatpush.msra.mxu0 %v41
    %280 = vmatpush.msra.mxu0 %v39
    %281 = vmatpush.msra.mxu0 %v37
    %282 = vmatpush.msra.mxu0 %v35
    %283 = vmatpush.msra.mxu0 %v33
    %284 = vmatpush.msra.mxu0 %v31
    %285 = vmatmul.f32.gmra.mxu0 %v247
    %v286 = vpop.f32.mrf.mxu0
    %v287 = vadd.f32 0.0, %v286
    %288 = vdwg.mxu0
    %v289 = vadd.f32 %v242, %v267
    %v290 = vadd.f32 %v243, %v287
    %v291 = vxor.u32 %v289, 2147483648
    %v292 = vxor.u32 %v290, 2147483648
    %v293 = vmul.f32 %v291, 1.442695
    %v294 = vpow.pop %v293
    %v295 = vmul.f32 %v292, 1.442695
    %v296 = vpow.pop %v295
    %v297 = vadd.f32 %v294, 1.0
    %v298 = vadd.f32 %v296, 1.0
    %v299 = vrcp.pop %v297
    %v300 = vmul.f32 %v297, %v299
    %v301 = vsub.f32 1.0, %v300
    %v302 = vmul.f32 %v299, %v301
    %v303 = vadd.f32 %v299, %v302
    %vm304 = vweird.f32 %v297
    %vm305 = vweird.f32 %v299
    %vm306 = vmor %vm304, %vm305
    %v307 = vsel %vm306, %v299, %v303
    %v308 = vand.u32 2147483647, %v297
    %vm309 = vcmp.eq.f32.partialorder %v308, 8.507059e+37
    %v310 = vand.u32 %v297, 2147483648
    %v311 = vor.u32 1.1754944e-38, %v310
    %v312 = vsel %vm309, %v311, %v307
    %v313 = vmul.f32 1.0, %v312
    %v314 = vrcp.pop %v298
    %v315 = vmul.f32 %v298, %v314
    %v316 = vsub.f32 1.0, %v315
    %v317 = vmul.f32 %v314, %v316
    %v318 = vadd.f32 %v314, %v317
    %vm319 = vweird.f32 %v298
    %vm320 = vweird.f32 %v314
    %vm321 = vmor %vm319, %vm320
    %v322 = vsel %vm321, %v314, %v318
    %v323 = vand.u32 2147483647, %v298
    %vm324 = vcmp.eq.f32.partialorder %v323, 8.507059e+37
    %v325 = vand.u32 %v298, 2147483648
    %v326 = vor.u32 1.1754944e-38, %v325
    %v327 = vsel %vm324, %v326, %v322
    %v328 = vmul.f32 1.0, %v327
    %v329 = vtanh.pop %v290
    %v330 = vmul.f32 %v313, %v237
    %v331 = vmul.f32 %v313, %v329
    %333 = vrot.lane.b32.xlu0 %v331, 64
    %v334 = vpop.permute.xlu0 %333
    %v336 = vadd.f32 %v330, %v334
    %v337 = vtanh.pop %v336
    %v338 = vmul.f32 %v328, %v337
    %v339 = vmax.f32 %v240, %v338
    %s340 = scalar_lea.vmem %s0, 48
    %v341 = vld [vmem:[%s340] sm:$0x3f]
    %v342 = vld [vmem:[%s340 + $0x8] sm:$0x3f]
    %344 = vrot.lane.b32.xlu0 %v338, 64
    %v345 = vpop.permute.xlu0 %344
    %v346 = vsel %vm48, %v345, 0
    %348 = vmatpush.msra.mxu0 0.0
    %349 = vmatpush.msra.mxu0 0.0
    %350 = vmatpush.msra.mxu0 0.0
    %351 = vmatpush.msra.mxu0 0.0
    %352 = vmatpush.msra.mxu0 0.0
    %353 = vmatpush.msra.mxu0 0.0
    %354 = vmatpush.msra.mxu0 0.0
    %355 = vmatpush.msra.mxu0 0.0
    %356 = vmatpush.msra.mxu0 %v44
    %357 = vmatpush.msra.mxu0 %v42
    %358 = vmatpush.msra.mxu0 %v40
    %359 = vmatpush.msra.mxu0 %v38
    %360 = vmatpush.msra.mxu0 %v36
    %361 = vmatpush.msra.mxu0 %v34
    %362 = vmatpush.msra.mxu0 %v32
    %363 = vmatpush.msra.mxu0 %v30
    %364 = vmatmul.f32.gmra.mxu0 %v346
    %v365 = vpop.f32.mrf.mxu0
    %v366 = vadd.f32 0.0, %v365
    %367 = vdwg.mxu0
    %368 = vmatpush.msra.mxu0 0.0
    %369 = vmatpush.msra.mxu0 0.0
    %370 = vmatpush.msra.mxu0 0.0
    %371 = vmatpush.msra.mxu0 0.0
    %372 = vmatpush.msra.mxu0 0.0
    %373 = vmatpush.msra.mxu0 0.0
    %374 = vmatpush.msra.mxu0 0.0
    %375 = vmatpush.msra.mxu0 0.0
    %376 = vmatpush.msra.mxu0 %v45
    %377 = vmatpush.msra.mxu0 %v43
    %378 = vmatpush.msra.mxu0 %v41
    %379 = vmatpush.msra.mxu0 %v39
    %380 = vmatpush.msra.mxu0 %v37
    %381 = vmatpush.msra.mxu0 %v35
    %382 = vmatpush.msra.mxu0 %v33
    %383 = vmatpush.msra.mxu0 %v31
    %384 = vmatmul.f32.gmra.mxu0 %v346
    %v385 = vpop.f32.mrf.mxu0
    %v386 = vadd.f32 0.0, %v385
    %387 = vdwg.mxu0
    %v388 = vadd.f32 %v341, %v366
    %v389 = vadd.f32 %v342, %v386
    %v390 = vxor.u32 %v388, 2147483648
    %v391 = vxor.u32 %v389, 2147483648
    %v392 = vmul.f32 %v390, 1.442695
    %v393 = vpow.pop %v392
    %v394 = vmul.f32 %v391, 1.442695
    %v395 = vpow.pop %v394
    %v396 = vadd.f32 %v393, 1.0
    %v397 = vadd.f32 %v395, 1.0
    %v398 = vrcp.pop %v396
    %v399 = vmul.f32 %v396, %v398
    %v400 = vsub.f32 1.0, %v399
    %v401 = vmul.f32 %v398, %v400
    %v402 = vadd.f32 %v398, %v401
    %vm403 = vweird.f32 %v396
    %vm404 = vweird.f32 %v398
    %vm405 = vmor %vm403, %vm404
    %v406 = vsel %vm405, %v398, %v402
    %v407 = vand.u32 2147483647, %v396
    %vm408 = vcmp.eq.f32.partialorder %v407, 8.507059e+37
    %v409 = vand.u32 %v396, 2147483648
    %v410 = vor.u32 1.1754944e-38, %v409
    %v411 = vsel %vm408, %v410, %v406
    %v412 = vmul.f32 1.0, %v411
    %v413 = vrcp.pop %v397
    %v414 = vmul.f32 %v397, %v413
    %v415 = vsub.f32 1.0, %v414
    %v416 = vmul.f32 %v413, %v415
    %v417 = vadd.f32 %v413, %v416
    %vm418 = vweird.f32 %v397
    %vm419 = vweird.f32 %v413
    %vm420 = vmor %vm418, %vm419
    %v421 = vsel %vm420, %v413, %v417
    %v422 = vand.u32 2147483647, %v397
    %vm423 = vcmp.eq.f32.partialorder %v422, 8.507059e+37
    %v424 = vand.u32 %v397, 2147483648
    %v425 = vor.u32 1.1754944e-38, %v424
    %v426 = vsel %vm423, %v425, %v421
    %v427 = vmul.f32 1.0, %v426
    %v428 = vtanh.pop %v389
    %v429 = vmul.f32 %v412, %v336
    %v430 = vmul.f32 %v412, %v428
    %432 = vrot.lane.b32.xlu0 %v430, 64
    %v433 = vpop.permute.xlu0 %432
    %v435 = vadd.f32 %v429, %v433
    %v436 = vtanh.pop %v435
    %v437 = vmul.f32 %v427, %v436
    %v438 = vmax.f32 %v339, %v437
    %s439 = scalar_lea.vmem %s0, 64
    %v440 = vld [vmem:[%s439] sm:$0x3f]
    %v441 = vld [vmem:[%s439 + $0x8] sm:$0x3f]
    %443 = vrot.lane.b32.xlu0 %v437, 64
    %v444 = vpop.permute.xlu0 %443
    %v445 = vsel %vm48, %v444, 0
    %447 = vmatpush.msra.mxu0 0.0
    %448 = vmatpush.msra.mxu0 0.0
    %449 = vmatpush.msra.mxu0 0.0
    %450 = vmatpush.msra.mxu0 0.0
    %451 = vmatpush.msra.mxu0 0.0
    %452 = vmatpush.msra.mxu0 0.0
    %453 = vmatpush.msra.mxu0 0.0
    %454 = vmatpush.msra.mxu0 0.0
    %455 = vmatpush.msra.mxu0 %v44
    %456 = vmatpush.msra.mxu0 %v42
    %457 = vmatpush.msra.mxu0 %v40
    %458 = vmatpush.msra.mxu0 %v38
    %459 = vmatpush.msra.mxu0 %v36
    %460 = vmatpush.msra.mxu0 %v34
    %461 = vmatpush.msra.mxu0 %v32
    %462 = vmatpush.msra.mxu0 %v30
    %463 = vmatmul.f32.gmra.mxu0 %v445
    %v464 = vpop.f32.mrf.mxu0
    %v465 = vadd.f32 0.0, %v464
    %466 = vdwg.mxu0
    %467 = vmatpush.msra.mxu0 0.0
    %468 = vmatpush.msra.mxu0 0.0
    %469 = vmatpush.msra.mxu0 0.0
    %470 = vmatpush.msra.mxu0 0.0
    %471 = vmatpush.msra.mxu0 0.0
    %472 = vmatpush.msra.mxu0 0.0
    %473 = vmatpush.msra.mxu0 0.0
    %474 = vmatpush.msra.mxu0 0.0
    %475 = vmatpush.msra.mxu0 %v45
    %476 = vmatpush.msra.mxu0 %v43
    %477 = vmatpush.msra.mxu0 %v41
    %478 = vmatpush.msra.mxu0 %v39
    %479 = vmatpush.msra.mxu0 %v37
    %480 = vmatpush.msra.mxu0 %v35
    %481 = vmatpush.msra.mxu0 %v33
    %482 = vmatpush.msra.mxu0 %v31
    %483 = vmatmul.f32.gmra.mxu0 %v445
    %v484 = vpop.f32.mrf.mxu0
    %v485 = vadd.f32 0.0, %v484
    %486 = vdwg.mxu0
    %v487 = vadd.f32 %v440, %v465
    %v488 = vadd.f32 %v441, %v485
    %v489 = vxor.u32 %v487, 2147483648
    %v490 = vxor.u32 %v488, 2147483648
    %v491 = vmul.f32 %v489, 1.442695
    %v492 = vpow.pop %v491
    %v493 = vmul.f32 %v490, 1.442695
    %v494 = vpow.pop %v493
    %v495 = vadd.f32 %v492, 1.0
    %v496 = vadd.f32 %v494, 1.0
    %v497 = vrcp.pop %v495
    %v498 = vmul.f32 %v495, %v497
    %v499 = vsub.f32 1.0, %v498
    %v500 = vmul.f32 %v497, %v499
    %v501 = vadd.f32 %v497, %v500
    %vm502 = vweird.f32 %v495
    %vm503 = vweird.f32 %v497
    %vm504 = vmor %vm502, %vm503
    %v505 = vsel %vm504, %v497, %v501
    %v506 = vand.u32 2147483647, %v495
    %vm507 = vcmp.eq.f32.partialorder %v506, 8.507059e+37
    %v508 = vand.u32 %v495, 2147483648
    %v509 = vor.u32 1.1754944e-38, %v508
    %v510 = vsel %vm507, %v509, %v505
    %v511 = vmul.f32 1.0, %v510
    %v512 = vrcp.pop %v496
    %v513 = vmul.f32 %v496, %v512
    %v514 = vsub.f32 1.0, %v513
    %v515 = vmul.f32 %v512, %v514
    %v516 = vadd.f32 %v512, %v515
    %vm517 = vweird.f32 %v496
    %vm518 = vweird.f32 %v512
    %vm519 = vmor %vm517, %vm518
    %v520 = vsel %vm519, %v512, %v516
    %v521 = vand.u32 2147483647, %v496
    %vm522 = vcmp.eq.f32.partialorder %v521, 8.507059e+37
    %v523 = vand.u32 %v496, 2147483648
    %v524 = vor.u32 1.1754944e-38, %v523
    %v525 = vsel %vm522, %v524, %v520
    %v526 = vmul.f32 1.0, %v525
    %v527 = vtanh.pop %v488
    %v528 = vmul.f32 %v511, %v435
    %v529 = vmul.f32 %v511, %v527
    %531 = vrot.lane.b32.xlu0 %v529, 64
    %v532 = vpop.permute.xlu0 %531
    %v534 = vadd.f32 %v528, %v532
    %v535 = vtanh.pop %v534
    %v536 = vmul.f32 %v526, %v535
    %v537 = vmax.f32 %v438, %v536
    %s538 = scalar_lea.vmem %s0, 80
    %v539 = vld [vmem:[%s538] sm:$0x3f]
    %v540 = vld [vmem:[%s538 + $0x8] sm:$0x3f]
    %542 = vrot.lane.b32.xlu0 %v536, 64
    %v543 = vpop.permute.xlu0 %542
    %v544 = vsel %vm48, %v543, 0
    %546 = vmatpush.msra.mxu0 0.0
    %547 = vmatpush.msra.mxu0 0.0
    %548 = vmatpush.msra.mxu0 0.0
    %549 = vmatpush.msra.mxu0 0.0
    %550 = vmatpush.msra.mxu0 0.0
    %551 = vmatpush.msra.mxu0 0.0
    %552 = vmatpush.msra.mxu0 0.0
    %553 = vmatpush.msra.mxu0 0.0
    %554 = vmatpush.msra.mxu0 %v44
    %555 = vmatpush.msra.mxu0 %v42
    %556 = vmatpush.msra.mxu0 %v40
    %557 = vmatpush.msra.mxu0 %v38
    %558 = vmatpush.msra.mxu0 %v36
    %559 = vmatpush.msra.mxu0 %v34
    %560 = vmatpush.msra.mxu0 %v32
    %561 = vmatpush.msra.mxu0 %v30
    %562 = vmatmul.f32.gmra.mxu0 %v544
    %v563 = vpop.f32.mrf.mxu0
    %v564 = vadd.f32 0.0, %v563
    %565 = vdwg.mxu0
    %566 = vmatpush.msra.mxu0 0.0
    %567 = vmatpush.msra.mxu0 0.0
    %568 = vmatpush.msra.mxu0 0.0
    %569 = vmatpush.msra.mxu0 0.0
    %570 = vmatpush.msra.mxu0 0.0
    %571 = vmatpush.msra.mxu0 0.0
    %572 = vmatpush.msra.mxu0 0.0
    %573 = vmatpush.msra.mxu0 0.0
    %574 = vmatpush.msra.mxu0 %v45
    %575 = vmatpush.msra.mxu0 %v43
    %576 = vmatpush.msra.mxu0 %v41
    %577 = vmatpush.msra.mxu0 %v39
    %578 = vmatpush.msra.mxu0 %v37
    %579 = vmatpush.msra.mxu0 %v35
    %580 = vmatpush.msra.mxu0 %v33
    %581 = vmatpush.msra.mxu0 %v31
    %582 = vmatmul.f32.gmra.mxu0 %v544
    %v583 = vpop.f32.mrf.mxu0
    %v584 = vadd.f32 0.0, %v583
    %585 = vdwg.mxu0
    %v586 = vadd.f32 %v539, %v564
    %v587 = vadd.f32 %v540, %v584
    %v588 = vxor.u32 %v586, 2147483648
    %v589 = vxor.u32 %v587, 2147483648
    %v590 = vmul.f32 %v588, 1.442695
    %v591 = vpow.pop %v590
    %v592 = vmul.f32 %v589, 1.442695
    %v593 = vpow.pop %v592
    %v594 = vadd.f32 %v591, 1.0
    %v595 = vadd.f32 %v593, 1.0
    %v596 = vrcp.pop %v594
    %v597 = vmul.f32 %v594, %v596
    %v598 = vsub.f32 1.0, %v597
    %v599 = vmul.f32 %v596, %v598
    %v600 = vadd.f32 %v596, %v599
    %vm601 = vweird.f32 %v594
    %vm602 = vweird.f32 %v596
    %vm603 = vmor %vm601, %vm602
    %v604 = vsel %vm603, %v596, %v600
    %v605 = vand.u32 2147483647, %v594
    %vm606 = vcmp.eq.f32.partialorder %v605, 8.507059e+37
    %v607 = vand.u32 %v594, 2147483648
    %v608 = vor.u32 1.1754944e-38, %v607
    %v609 = vsel %vm606, %v608, %v604
    %v610 = vmul.f32 1.0, %v609
    %v611 = vrcp.pop %v595
    %v612 = vmul.f32 %v595, %v611
    %v613 = vsub.f32 1.0, %v612
    %v614 = vmul.f32 %v611, %v613
    %v615 = vadd.f32 %v611, %v614
    %vm616 = vweird.f32 %v595
    %vm617 = vweird.f32 %v611
    %vm618 = vmor %vm616, %vm617
    %v619 = vsel %vm618, %v611, %v615
    %v620 = vand.u32 2147483647, %v595
    %vm621 = vcmp.eq.f32.partialorder %v620, 8.507059e+37
    %v622 = vand.u32 %v595, 2147483648
    %v623 = vor.u32 1.1754944e-38, %v622
    %v624 = vsel %vm621, %v623, %v619
    %v625 = vmul.f32 1.0, %v624
    %v626 = vtanh.pop %v587
    %v627 = vmul.f32 %v610, %v534
    %v628 = vmul.f32 %v610, %v626
    %630 = vrot.lane.b32.xlu0 %v628, 64
    %v631 = vpop.permute.xlu0 %630
    %v633 = vadd.f32 %v627, %v631
    %v634 = vtanh.pop %v633
    %v635 = vmul.f32 %v625, %v634
    %v636 = vmax.f32 %v537, %v635
    %s637 = scalar_lea.vmem %s0, 96
    %v638 = vld [vmem:[%s637] sm:$0x3f]
    %v639 = vld [vmem:[%s637 + $0x8] sm:$0x3f]
    %641 = vrot.lane.b32.xlu0 %v635, 64
    %v642 = vpop.permute.xlu0 %641
    %v643 = vsel %vm48, %v642, 0
    %645 = vmatpush.msra.mxu0 0.0
    %646 = vmatpush.msra.mxu0 0.0
    %647 = vmatpush.msra.mxu0 0.0
    %648 = vmatpush.msra.mxu0 0.0
    %649 = vmatpush.msra.mxu0 0.0
    %650 = vmatpush.msra.mxu0 0.0
    %651 = vmatpush.msra.mxu0 0.0
    %652 = vmatpush.msra.mxu0 0.0
    %653 = vmatpush.msra.mxu0 %v44
    %654 = vmatpush.msra.mxu0 %v42
    %655 = vmatpush.msra.mxu0 %v40
    %656 = vmatpush.msra.mxu0 %v38
    %657 = vmatpush.msra.mxu0 %v36
    %658 = vmatpush.msra.mxu0 %v34
    %659 = vmatpush.msra.mxu0 %v32
    %660 = vmatpush.msra.mxu0 %v30
    %661 = vmatmul.f32.gmra.mxu0 %v643
    %v662 = vpop.f32.mrf.mxu0
    %v663 = vadd.f32 0.0, %v662
    %664 = vdwg.mxu0
    %665 = vmatpush.msra.mxu0 0.0
    %666 = vmatpush.msra.mxu0 0.0
    %667 = vmatpush.msra.mxu0 0.0
    %668 = vmatpush.msra.mxu0 0.0
    %669 = vmatpush.msra.mxu0 0.0
    %670 = vmatpush.msra.mxu0 0.0
    %671 = vmatpush.msra.mxu0 0.0
    %672 = vmatpush.msra.mxu0 0.0
    %673 = vmatpush.msra.mxu0 %v45
    %674 = vmatpush.msra.mxu0 %v43
    %675 = vmatpush.msra.mxu0 %v41
    %676 = vmatpush.msra.mxu0 %v39
    %677 = vmatpush.msra.mxu0 %v37
    %678 = vmatpush.msra.mxu0 %v35
    %679 = vmatpush.msra.mxu0 %v33
    %680 = vmatpush.msra.mxu0 %v31
    %681 = vmatmul.f32.gmra.mxu0 %v643
    %v682 = vpop.f32.mrf.mxu0
    %v683 = vadd.f32 0.0, %v682
    %684 = vdwg.mxu0
    %v685 = vadd.f32 %v638, %v663
    %v686 = vadd.f32 %v639, %v683
    %v687 = vxor.u32 %v685, 2147483648
    %v688 = vxor.u32 %v686, 2147483648
    %v689 = vmul.f32 %v687, 1.442695
    %v690 = vpow.pop %v689
    %v691 = vmul.f32 %v688, 1.442695
    %v692 = vpow.pop %v691
    %v693 = vadd.f32 %v690, 1.0
    %v694 = vadd.f32 %v692, 1.0
    %v695 = vrcp.pop %v693
    %v696 = vmul.f32 %v693, %v695
    %v697 = vsub.f32 1.0, %v696
    %v698 = vmul.f32 %v695, %v697
    %v699 = vadd.f32 %v695, %v698
    %vm700 = vweird.f32 %v693
    %vm701 = vweird.f32 %v695
    %vm702 = vmor %vm700, %vm701
    %v703 = vsel %vm702, %v695, %v699
    %v704 = vand.u32 2147483647, %v693
    %vm705 = vcmp.eq.f32.partialorder %v704, 8.507059e+37
    %v706 = vand.u32 %v693, 2147483648
    %v707 = vor.u32 1.1754944e-38, %v706
    %v708 = vsel %vm705, %v707, %v703
    %v709 = vmul.f32 1.0, %v708
    %v710 = vrcp.pop %v694
    %v711 = vmul.f32 %v694, %v710
    %v712 = vsub.f32 1.0, %v711
    %v713 = vmul.f32 %v710, %v712
    %v714 = vadd.f32 %v710, %v713
    %vm715 = vweird.f32 %v694
    %vm716 = vweird.f32 %v710
    %vm717 = vmor %vm715, %vm716
    %v718 = vsel %vm717, %v710, %v714
    %v719 = vand.u32 2147483647, %v694
    %vm720 = vcmp.eq.f32.partialorder %v719, 8.507059e+37
    %v721 = vand.u32 %v694, 2147483648
    %v722 = vor.u32 1.1754944e-38, %v721
    %v723 = vsel %vm720, %v722, %v718
    %v724 = vmul.f32 1.0, %v723
    %v725 = vtanh.pop %v686
    %v726 = vmul.f32 %v709, %v633
    %v727 = vmul.f32 %v709, %v725
    %729 = vrot.lane.b32.xlu0 %v727, 64
    %v730 = vpop.permute.xlu0 %729
    %v732 = vadd.f32 %v726, %v730
    %v733 = vtanh.pop %v732
    %v734 = vmul.f32 %v724, %v733
    %v735 = vmax.f32 %v636, %v734
    %s736 = scalar_lea.vmem %s0, 112
    %v737 = vld [vmem:[%s736] sm:$0x3f]
    %v738 = vld [vmem:[%s736 + $0x8] sm:$0x3f]
    %740 = vrot.lane.b32.xlu0 %v734, 64
    %v741 = vpop.permute.xlu0 %740
    %v742 = vsel %vm48, %v741, 0
    %744 = vmatpush.msra.mxu0 0.0
    %745 = vmatpush.msra.mxu0 0.0
    %746 = vmatpush.msra.mxu0 0.0
    %747 = vmatpush.msra.mxu0 0.0
    %748 = vmatpush.msra.mxu0 0.0
    %749 = vmatpush.msra.mxu0 0.0
    %750 = vmatpush.msra.mxu0 0.0
    %751 = vmatpush.msra.mxu0 0.0
    %752 = vmatpush.msra.mxu0 %v44
    %753 = vmatpush.msra.mxu0 %v42
    %754 = vmatpush.msra.mxu0 %v40
    %755 = vmatpush.msra.mxu0 %v38
    %756 = vmatpush.msra.mxu0 %v36
    %757 = vmatpush.msra.mxu0 %v34
    %758 = vmatpush.msra.mxu0 %v32
    %759 = vmatpush.msra.mxu0 %v30
    %760 = vmatmul.f32.gmra.mxu0 %v742
    %v761 = vpop.f32.mrf.mxu0
    %v762 = vadd.f32 0.0, %v761
    %763 = vdwg.mxu0
    %764 = vmatpush.msra.mxu0 0.0
    %765 = vmatpush.msra.mxu0 0.0
    %766 = vmatpush.msra.mxu0 0.0
    %767 = vmatpush.msra.mxu0 0.0
    %768 = vmatpush.msra.mxu0 0.0
    %769 = vmatpush.msra.mxu0 0.0
    %770 = vmatpush.msra.mxu0 0.0
    %771 = vmatpush.msra.mxu0 0.0
    %772 = vmatpush.msra.mxu0 %v45
    %773 = vmatpush.msra.mxu0 %v43
    %774 = vmatpush.msra.mxu0 %v41
    %775 = vmatpush.msra.mxu0 %v39
    %776 = vmatpush.msra.mxu0 %v37
    %777 = vmatpush.msra.mxu0 %v35
    %778 = vmatpush.msra.mxu0 %v33
    %779 = vmatpush.msra.mxu0 %v31
    %780 = vmatmul.f32.gmra.mxu0 %v742
    %v781 = vpop.f32.mrf.mxu0
    %v782 = vadd.f32 0.0, %v781
    %783 = vdwg.mxu0
    %v784 = vadd.f32 %v737, %v762
    %v785 = vadd.f32 %v738, %v782
    %v786 = vxor.u32 %v784, 2147483648
    %v787 = vxor.u32 %v785, 2147483648
    %v788 = vmul.f32 %v786, 1.442695
    %v789 = vpow.pop %v788
    %v790 = vmul.f32 %v787, 1.442695
    %v791 = vpow.pop %v790
    %v792 = vadd.f32 %v789, 1.0
    %v793 = vadd.f32 %v791, 1.0
    %v794 = vrcp.pop %v792
    %v795 = vmul.f32 %v792, %v794
    %v796 = vsub.f32 1.0, %v795
    %v797 = vmul.f32 %v794, %v796
    %v798 = vadd.f32 %v794, %v797
    %vm799 = vweird.f32 %v792
    %vm800 = vweird.f32 %v794
    %vm801 = vmor %vm799, %vm800
    %v802 = vsel %vm801, %v794, %v798
    %v803 = vand.u32 2147483647, %v792
    %vm804 = vcmp.eq.f32.partialorder %v803, 8.507059e+37
    %v805 = vand.u32 %v792, 2147483648
    %v806 = vor.u32 1.1754944e-38, %v805
    %v807 = vsel %vm804, %v806, %v802
    %v808 = vmul.f32 1.0, %v807
    %v809 = vrcp.pop %v793
    %v810 = vmul.f32 %v793, %v809
    %v811 = vsub.f32 1.0, %v810
    %v812 = vmul.f32 %v809, %v811
    %v813 = vadd.f32 %v809, %v812
    %vm814 = vweird.f32 %v793
    %vm815 = vweird.f32 %v809
    %vm816 = vmor %vm814, %vm815
    %v817 = vsel %vm816, %v809, %v813
    %v818 = vand.u32 2147483647, %v793
    %vm819 = vcmp.eq.f32.partialorder %v818, 8.507059e+37
    %v820 = vand.u32 %v793, 2147483648
    %v821 = vor.u32 1.1754944e-38, %v820
    %v822 = vsel %vm819, %v821, %v817
    %v823 = vmul.f32 1.0, %v822
    %v824 = vtanh.pop %v785
    %v825 = vmul.f32 %v808, %v732
    %v826 = vmul.f32 %v808, %v824
    %828 = vrot.lane.b32.xlu0 %v826, 64
    %v829 = vpop.permute.xlu0 %828
    %v831 = vadd.f32 %v825, %v829
    %v832 = vtanh.pop %v831
    %v833 = vmul.f32 %v823, %v832
    %v834 = vmax.f32 %v735, %v833
    %836 = vrot.lane.b32.xlu0 %v834, 64
    %v837 = vpop.permute.xlu0 %836
    %v839 = vrot.slane %v834, 2
    %v841 = vrot.slane %v834, 4
    %842 = vrot.lane.b32.xlu0 %v841, 64
    %v843 = vpop.permute.xlu0 %842
    %v844 = vsel %vm48, %v837, %v839
    %v845 = vld [vmem:[%s2] sm:$0xff]
    %v846 = vld [vmem:[%s2 + $0x8] sm:$0xff]
    %v847 = vld [vmem:[%s2 + $0x10] sm:$0xff]
    %v848 = vld [vmem:[%s2 + $0x18] sm:$0xff]
    %v849 = vld [vmem:[%s2 + $0x20] sm:$0xff]
    %v850 = vld [vmem:[%s2 + $0x28] sm:$0xff]
    %v851 = vld [vmem:[%s2 + $0x30] sm:$0xff]
    %v852 = vld [vmem:[%s2 + $0x38] sm:$0xff]
    %v853 = vld [vmem:[%s2 + $0x40] sm:$0xff]
    %v854 = vld [vmem:[%s2 + $0x48] sm:$0xff]
    %v855 = vld [vmem:[%s2 + $0x50] sm:$0xff]
    %v856 = vld [vmem:[%s2 + $0x58] sm:$0xff]
    %v857 = vld [vmem:[%s2 + $0x60] sm:$0xff]
    %v858 = vld [vmem:[%s2 + $0x68] sm:$0xff]
    %v859 = vld [vmem:[%s2 + $0x70] sm:$0xff]
    %v860 = vld [vmem:[%s2 + $0x78] sm:$0xff]
    %v861 = vld [vmem:[%s2 + $0x80] sm:$0xff]
    %v862 = vld [vmem:[%s2 + $0x88] sm:$0xff]
    %v863 = vld [vmem:[%s2 + $0x90] sm:$0xff]
    %v864 = vld [vmem:[%s2 + $0x98] sm:$0xff]
    %v865 = vld [vmem:[%s2 + $0xa0] sm:$0xff]
    %v866 = vld [vmem:[%s2 + $0xa8] sm:$0xff]
    %v867 = vld [vmem:[%s2 + $0xb0] sm:$0xff]
    %v868 = vld [vmem:[%s2 + $0xb8] sm:$0xff]
    %v869 = vld [vmem:[%s2 + $0xc0] sm:$0xff]
    %v870 = vld [vmem:[%s2 + $0xc8] sm:$0xff]
    %v871 = vld [vmem:[%s2 + $0xd0] sm:$0xff]
    %v872 = vld [vmem:[%s2 + $0xd8] sm:$0xff]
    %v873 = vld [vmem:[%s2 + $0xe0] sm:$0xff]
    %v874 = vld [vmem:[%s2 + $0xe8] sm:$0xff]
    %v875 = vld [vmem:[%s2 + $0xf0] sm:$0xff]
    %v876 = vld [vmem:[%s2 + $0xf8] sm:$0xff]
    %v877 = vld [vmem:[%s2 + $0x100] sm:$0xff]
    %v878 = vld [vmem:[%s2 + $0x108] sm:$0xff]
    %v879 = vld [vmem:[%s2 + $0x110] sm:$0xff]
    %v880 = vld [vmem:[%s2 + $0x118] sm:$0xff]
    %v881 = vld [vmem:[%s2 + $0x120] sm:$0xff]
    %v882 = vld [vmem:[%s2 + $0x128] sm:$0xff]
    %v883 = vld [vmem:[%s2 + $0x130] sm:$0xff]
    %v884 = vld [vmem:[%s2 + $0x138] sm:$0xff]
    %v885 = vld [vmem:[%s2 + $0x140] sm:$0xff]
    %v886 = vld [vmem:[%s2 + $0x148] sm:$0xff]
    %v887 = vld [vmem:[%s2 + $0x150] sm:$0xff]
    %v888 = vld [vmem:[%s2 + $0x158] sm:$0xff]
    %v889 = vld [vmem:[%s2 + $0x160] sm:$0xff]
    %v890 = vld [vmem:[%s2 + $0x168] sm:$0xff]
    %v891 = vld [vmem:[%s2 + $0x170] sm:$0xff]
    %v892 = vld [vmem:[%s2 + $0x178] sm:$0xff]
    %v893 = vld [vmem:[%s3] sm:$0x3]
    %v895 = vperm.slane %v893, 0
    %v896 = vperm.slane %v893, 1
    %v899 = vsel %vm48, %v843, 0
    %901 = vmatpush.msra.mxu0 %v875
    %902 = vmatpush.msra.mxu0 %v873
    %903 = vmatpush.msra.mxu0 %v871
    %904 = vmatpush.msra.mxu0 %v869
    %905 = vmatpush.msra.mxu0 %v867
    %906 = vmatpush.msra.mxu0 %v865
    %907 = vmatpush.msra.mxu0 %v863
    %908 = vmatpush.msra.mxu0 %v861
    %909 = vmatpush.msra.mxu0 %v859
    %910 = vmatpush.msra.mxu0 %v857
    %911 = vmatpush.msra.mxu0 %v855
    %912 = vmatpush.msra.mxu0 %v853
    %913 = vmatpush.msra.mxu0 %v851
    %914 = vmatpush.msra.mxu0 %v849
    %915 = vmatpush.msra.mxu0 %v847
    %916 = vmatpush.msra.mxu0 %v845
    %917 = vmatmul.f32.gmra.mxu0 %v844
    %v918 = vpop.f32.mrf.mxu0
    %v919 = vadd.f32 %v895, %v918
    %920 = vdwg.mxu0
    %921 = vmatpush.msra.mxu0 0.0
    %922 = vmatpush.msra.mxu0 0.0
    %923 = vmatpush.msra.mxu0 0.0
    %924 = vmatpush.msra.mxu0 0.0
    %925 = vmatpush.msra.mxu0 0.0
    %926 = vmatpush.msra.mxu0 0.0
    %927 = vmatpush.msra.mxu0 0.0
    %928 = vmatpush.msra.mxu0 0.0
    %929 = vmatpush.msra.mxu0 %v891
    %930 = vmatpush.msra.mxu0 %v889
    %931 = vmatpush.msra.mxu0 %v887
    %932 = vmatpush.msra.mxu0 %v885
    %933 = vmatpush.msra.mxu0 %v883
    %934 = vmatpush.msra.mxu0 %v881
    %935 = vmatpush.msra.mxu0 %v879
    %936 = vmatpush.msra.mxu0 %v877
    %937 = vmatmul.f32.gmra.mxu0 %v899
    %v938 = vpop.f32.mrf.mxu0
    %v939 = vadd.f32 %v919, %v938
    %940 = vdwg.mxu0
    %941 = vmatpush.msra.mxu0 %v876
    %942 = vmatpush.msra.mxu0 %v874
    %943 = vmatpush.msra.mxu0 %v872
    %944 = vmatpush.msra.mxu0 %v870
    %945 = vmatpush.msra.mxu0 %v868
    %946 = vmatpush.msra.mxu0 %v866
    %947 = vmatpush.msra.mxu0 %v864
    %948 = vmatpush.msra.mxu0 %v862
    %949 = vmatpush.msra.mxu0 %v860
    %950 = vmatpush.msra.mxu0 %v858
    %951 = vmatpush.msra.mxu0 %v856
    %952 = vmatpush.msra.mxu0 %v854
    %953 = vmatpush.msra.mxu0 %v852
    %954 = vmatpush.msra.mxu0 %v850
    %955 = vmatpush.msra.mxu0 %v848
    %956 = vmatpush.msra.mxu0 %v846
    %957 = vmatmul.f32.gmra.mxu0 %v844
    %v958 = vpop.f32.mrf.mxu0
    %v959 = vadd.f32 %v896, %v958
    %960 = vdwg.mxu0
    %961 = vmatpush.msra.mxu0 0.0
    %962 = vmatpush.msra.mxu0 0.0
    %963 = vmatpush.msra.mxu0 0.0
    %964 = vmatpush.msra.mxu0 0.0
    %965 = vmatpush.msra.mxu0 0.0
    %966 = vmatpush.msra.mxu0 0.0
    %967 = vmatpush.msra.mxu0 0.0
    %968 = vmatpush.msra.mxu0 0.0
    %969 = vmatpush.msra.mxu0 %v892
    %970 = vmatpush.msra.mxu0 %v890
    %971 = vmatpush.msra.mxu0 %v888
    %972 = vmatpush.msra.mxu0 %v886
    %973 = vmatpush.msra.mxu0 %v884
    %974 = vmatpush.msra.mxu0 %v882
    %975 = vmatpush.msra.mxu0 %v880
    %976 = vmatpush.msra.mxu0 %v878
    %977 = vmatmul.f32.gmra.mxu0 %v899
    %v978 = vpop.f32.mrf.mxu0
    %v979 = vadd.f32 %v959, %v978
    %980 = vdwg.mxu0
    %v981 = vmax.f32 %v939, 0.0
    %v982 = vmax.f32 %v979, 0.0
    %v983 = vld [vmem:[%s4] sm:$0xff]
    %v984 = vld [vmem:[%s4 + $0x8] sm:$0xff]
    %v985 = vld [vmem:[%s4 + $0x10] sm:$0xff]
    %v986 = vld [vmem:[%s4 + $0x18] sm:$0xff]
    %v987 = vld [vmem:[%s4 + $0x20] sm:$0xff]
    %v988 = vld [vmem:[%s4 + $0x28] sm:$0xff]
    %v989 = vld [vmem:[%s4 + $0x30] sm:$0xff]
    %v990 = vld [vmem:[%s4 + $0x38] sm:$0xff]
    %v991 = vld [vmem:[%s4 + $0x40] sm:$0xff]
    %v992 = vld [vmem:[%s4 + $0x48] sm:$0xff]
    %v993 = vld [vmem:[%s4 + $0x50] sm:$0xff]
    %v994 = vld [vmem:[%s4 + $0x58] sm:$0xff]
    %v995 = vld [vmem:[%s4 + $0x60] sm:$0xff]
    %v996 = vld [vmem:[%s4 + $0x68] sm:$0xff]
    %v997 = vld [vmem:[%s4 + $0x70] sm:$0xff]
    %v998 = vld [vmem:[%s4 + $0x78] sm:$0xff]
    %v999 = vld [vmem:[%s4 + $0x80] sm:$0xff]
    %v1000 = vld [vmem:[%s4 + $0x88] sm:$0xff]
    %v1001 = vld [vmem:[%s4 + $0x90] sm:$0xff]
    %v1002 = vld [vmem:[%s4 + $0x98] sm:$0xff]
    %v1003 = vld [vmem:[%s4 + $0xa0] sm:$0xff]
    %v1004 = vld [vmem:[%s4 + $0xa8] sm:$0xff]
    %v1005 = vld [vmem:[%s4 + $0xb0] sm:$0xff]
    %v1006 = vld [vmem:[%s4 + $0xb8] sm:$0xff]
    %v1007 = vld [vmem:[%s4 + $0xc0] sm:$0xff]
    %v1008 = vld [vmem:[%s4 + $0xc8] sm:$0xff]
    %v1009 = vld [vmem:[%s4 + $0xd0] sm:$0xff]
    %v1010 = vld [vmem:[%s4 + $0xd8] sm:$0xff]
    %v1011 = vld [vmem:[%s4 + $0xe0] sm:$0xff]
    %v1012 = vld [vmem:[%s4 + $0xe8] sm:$0xff]
    %v1013 = vld [vmem:[%s4 + $0xf0] sm:$0xff]
    %v1014 = vld [vmem:[%s4 + $0xf8] sm:$0xff]
    %v1015 = vld [vmem:[%s5] sm:$0x1]
    %v1017 = vperm.slane %v1015, 0
    %1019 = vmatpush.msra.mxu0 %v998
    %1020 = vmatpush.msra.mxu0 %v997
    %1021 = vmatpush.msra.mxu0 %v996
    %1022 = vmatpush.msra.mxu0 %v995
    %1023 = vmatpush.msra.mxu0 %v994
    %1024 = vmatpush.msra.mxu0 %v993
    %1025 = vmatpush.msra.mxu0 %v992
    %1026 = vmatpush.msra.mxu0 %v991
    %1027 = vmatpush.msra.mxu0 %v990
    %1028 = vmatpush.msra.mxu0 %v989
    %1029 = vmatpush.msra.mxu0 %v988
    %1030 = vmatpush.msra.mxu0 %v987
    %1031 = vmatpush.msra.mxu0 %v986
    %1032 = vmatpush.msra.mxu0 %v985
    %1033 = vmatpush.msra.mxu0 %v984
    %1034 = vmatpush.msra.mxu0 %v983
    %1035 = vmatmul.f32.gmra.mxu0 %v981
    %v1036 = vpop.f32.mrf.mxu0
    %v1037 = vadd.f32 %v1017, %v1036
    %1038 = vdwg.mxu0
    %1039 = vmatpush.msra.mxu0 %v1014
    %1040 = vmatpush.msra.mxu0 %v1013
    %1041 = vmatpush.msra.mxu0 %v1012
    %1042 = vmatpush.msra.mxu0 %v1011
    %1043 = vmatpush.msra.mxu0 %v1010
    %1044 = vmatpush.msra.mxu0 %v1009
    %1045 = vmatpush.msra.mxu0 %v1008
    %1046 = vmatpush.msra.mxu0 %v1007
    %1047 = vmatpush.msra.mxu0 %v1006
    %1048 = vmatpush.msra.mxu0 %v1005
    %1049 = vmatpush.msra.mxu0 %v1004
    %1050 = vmatpush.msra.mxu0 %v1003
    %1051 = vmatpush.msra.mxu0 %v1002
    %1052 = vmatpush.msra.mxu0 %v1001
    %1053 = vmatpush.msra.mxu0 %v1000
    %1054 = vmatpush.msra.mxu0 %v999
    %1055 = vmatmul.f32.gmra.mxu0 %v982
    %v1056 = vpop.f32.mrf.mxu0
    %v1057 = vadd.f32 %v1037, %v1056
    %1058 = vdwg.mxu0
    %v1059 = vmax.f32 %v1057, 0.0
    %v1060 = vld [vmem:[%s6] sm:$0xff]
    %v1061 = vld [vmem:[%s6 + $0x8] sm:$0xff]
    %v1062 = vld [vmem:[%s6 + $0x10] sm:$0xff]
    %v1063 = vld [vmem:[%s6 + $0x18] sm:$0xff]
    %v1064 = vld [vmem:[%s7] sm:$0x1]
    %v1066 = vperm.slane %v1064, 0
    %vm1068 = vcmask 261120
    %v1070 = vsel %vm1068, %v1059, 0
    %1072 = vmatpush.msra.mxu0 0.0
    %1073 = vmatpush.msra.mxu0 0.0
    %1074 = vmatpush.msra.mxu0 0.0
    %1075 = vmatpush.msra.mxu0 0.0
    %1076 = vmatpush.msra.mxu0 0.0
    %1077 = vmatpush.msra.mxu0 0.0
    %1078 = vmatpush.msra.mxu0 0.0
    %1079 = vmatpush.msra.mxu0 0.0
    %1080 = vmatpush.msra.mxu0 0.0
    %1081 = vmatpush.msra.mxu0 0.0
    %1082 = vmatpush.msra.mxu0 0.0
    %1083 = vmatpush.msra.mxu0 0.0
    %1084 = vmatpush.msra.mxu0 %v1063
    %1085 = vmatpush.msra.mxu0 %v1062
    %1086 = vmatpush.msra.mxu0 %v1061
    %1087 = vmatpush.msra.mxu0 %v1060
    %1088 = vmatmul.f32.gmra.mxu0 %v1070
    %v1089 = vpop.f32.mrf.mxu0
    %v1090 = vadd.f32 %v1066, %v1089
    %1091 = vdwg.mxu0
    %vm1092 = vcmask 9216
    %1093 = vst.msk [vmem:[#allocation2] sm:$0x3] %vm1092, %v1090
    // Predicated region
    $region34: #{net_multi_forward.1} parent=1 // pred_check
      _
    $region35: #{net_multi_forward.1} parent=1 // pred_check_branch
      %1095 = sbr.rel (0) target = $region37
    $region36: #{net_multi_forward.1} parent=1 // pred_region
      %1097 = vsyncadd [#allocation3], 0
      %s1099 = sshll.u32 [#allocation2], 4
      %s1100 = int_to_ptr.vmem [resolvable:$true] %s1099
      %s1101 = sshll.u32 %s8, 4
      %s1102 = int_to_ptr.hbm [resolvable:$true] %s1101
      %1104 = dma.vmem_to_hbm [thread:$0]  %s1100, 32, %s1102, [#allocation3]
    $region37: #{net_multi_forward.1} parent=1 // pred_fallthru
      _
    // Predicated region
    $region38: #{net_multi_forward.1} parent=1 // pred_check
      _
    $region39: #{net_multi_forward.1} parent=1 // pred_check_branch
      %1106 = sbr.rel (0) target = $region41
    $region40: #{net_multi_forward.1} parent=1 // pred_region
      %1108 = dma.done [#allocation3], 32
    $region41: #{net_multi_forward.1} parent=1 // pred_fallthru
      _
    %1109 = vsyncpa [#allocation3], 1

</llo_original>
